<compile_context>
chip_gen: v7x
topology: tpu7x:2x2x1
jax: 0.10.0
libtpu: 0.0.40
codegen_flags: <defaults>
</compile_context>

<pallas_src>
import math
import functools

import jax
import jax.numpy as jnp
from jax.experimental import pallas as pl
from jax.experimental.pallas import tpu as pltpu

_EPS = 1e-6
_INV_SQRT2 = 1.0 / math.sqrt(2.0)


# ----------------------------- small helpers ------------------------------

def _pick_tile(n, preferred=(256, 128, 64, 32, 16)):
    """Largest preferred tile that divides n, else the full (unblocked) dim."""
    for t in preferred:
        if n % t == 0:
            return t
    return n


def _vmem_limit_bytes(default=48 * 1024 * 1024):
    """Scoped-VMEM limit with headroom below physical (64 MiB v7x, 128 MiB v5e/v6e)."""
    try:
        cap = getattr(pltpu.get_tpu_info(), "vmem_capacity_bytes", None)
        if cap:
            return min(int(cap * 3 // 4), 96 * 1024 * 1024)
    except Exception:
        pass
    return default


def _layernorm_f32(x, gamma, beta):
    mu = jnp.mean(x, axis=-1, keepdims=True)
    xc = x - mu
    var = jnp.mean(xc * xc, axis=-1, keepdims=True)
    return xc * jax.lax.rsqrt(var + _EPS) * gamma + beta


def _erf(x):
    # Abramowitz & Stegun 7.1.26, max abs error ~1.5e-7 (~f32 eps) -> exact-form
    # GELU, matching torch.nn.GELU() default.
    # TODO(synk): on v5e consider tanh-approx GELU (EUP) if the VALU is the binding slot.
    a1, a2, a3, a4, a5 = (0.254829592, -0.284496736, 1.421413741,
                          -1.453152027, 1.061405429)
    p = 0.3275911
    ax = jnp.abs(x)
    t = 1.0 / (1.0 + p * ax)
    poly = ((((a5 * t + a4) * t + a3) * t + a2) * t + a1) * t
    e = 1.0 - poly * jnp.exp(-ax * ax)
    return jnp.where(x >= 0.0, e, -e)


def _gelu_exact(x):
    return 0.5 * x * (1.0 + _erf(x * _INV_SQRT2))


# ------------------------------- kernels -----------------------------------

def _ln_qkv_kernel(x_ref, g_ref, b_ref, w_ref, bias_ref, o_ref, y_sc):
    """LN1 + qkv projection. grid = (B, token-tiles, 3C-column-tiles)."""
    @pl.when(pl.program_id(2) == 0)
    def _():
        y = _layernorm_f32(x_ref[0], g_ref[...], b_ref[...])      # f32
        y_sc[...] = y.astype(jnp.bfloat16)

    acc = jnp.dot(y_sc[...], w_ref[...],
                  preferred_element_type=jnp.float32)             # bf16 MXU, f32 acc
    o_ref[0] = (acc + bias_ref[...]).astype(o_ref.dtype)


def _flash_attn_kernel(scale, q_ref, k_ref, v_ref, o_ref, m_sc, l_sc, acc_sc):
    """Online-softmax flash attention. grid = (B, H, Q-tiles, KV-tiles)."""
    kv = pl.program_id(3)

    @pl.when(kv == 0)
    def _():
        m_sc[...] = jnp.full_like(m_sc, -jnp.inf)
        l_sc[...] = jnp.zeros_like(l_sc)
        acc_sc[...] = jnp.zeros_like(acc_sc)

    q = q_ref[0, 0]                                               # (tq, D) bf16
    k = k_ref[0, 0]                                               # (tk, D) bf16
    v = v_ref[0, 0]                                               # (tk, D) bf16

    s = jax.lax.dot_general(q, k, (((1,), (1,)), ((), ())),
                            preferred_element_type=jnp.float32) * scale
    m_prev = m_sc[...]
    m_new = jnp.maximum(m_prev, jnp.max(s, axis=-1, keepdims=True))
    alpha = jnp.exp(m_prev - m_new)
    p = jnp.exp(s - m_new)
    l_sc[...] = alpha * l_sc[...] + jnp.sum(p, axis=-1, keepdims=True)
    acc_sc[...] = alpha * acc_sc[...] + jnp.dot(
        p.astype(v.dtype), v, preferred_element_type=jnp.float32)
    m_sc[...] = m_new

    @pl.when(kv == pl.num_programs(3) - 1)
    def _():
        inv_l = pl.reciprocal(l_sc[...], approx=True)             # EUP, not VALU divide
        o_ref[0, 0] = (acc_sc[...] * inv_l).astype(o_ref.dtype)


def _proj_mlp_kernel(x_ref, a_ref, wp_ref, bp_ref, g2_ref, b2_ref,
                     w1_ref, bf1_ref, w2_ref, bf2_ref, o_ref,
                     x1_sc, y2_sc, acc_sc):
    """proj + residual1 + LN2 + MLP + residual2.
    grid = (B, token-tiles, hidden-column-tiles); fc2 accumulated in f32 VMEM."""
    j = pl.program_id(2)

    @pl.when(j == 0)
    def _():
        ao = jnp.dot(a_ref[0], wp_ref[...],
                     preferred_element_type=jnp.float32) + bp_ref[...]
        x1 = x_ref[0] + ao                                        # residual 1, f32
        x1_sc[...] = x1
        y2_sc[...] = _layernorm_f32(x1, g2_ref[...], b2_ref[...]).astype(jnp.bfloat16)
        acc_sc[...] = jnp.zeros_like(acc_sc)

    h = jnp.dot(y2_sc[...], w1_ref[...],
                preferred_element_type=jnp.float32) + bf1_ref[...]
    h = _gelu_exact(h)                                            # f32
    acc_sc[...] += jnp.dot(h.astype(jnp.bfloat16), w2_ref[...],
                           preferred_element_type=jnp.float32)

    @pl.when(j == pl.num_programs(2) - 1)
    def _():
        o_ref[0] = (x1_sc[...] + acc_sc[...] + bf2_ref[...]).astype(o_ref.dtype)


# ------------------------------- wrapper ------------------------------------

def _vit_block_impl(x, params, num_heads):
    """x: (B, N, C) float32. params: dict of pre-transposed weights/biases."""
    B, N, C = x.shape
    H = num_heads
    D = C // H
    hidden = params["w1"].shape[1]
    scale = D ** -0.5
    f32, bf16 = jnp.float32, jnp.bfloat16

    tn = _pick_tile(N)                         # token tile (MLP / projections)
    tq = tk = _pick_tile(N)                    # attention q / kv tiles
    tc3 = _pick_tile(3 * C, (512, 256, 128))   # qkv-weight column tile
    th = _pick_tile(hidden, (512, 256, 128))   # MLP hidden column tile
    vmem_limit = _vmem_limit_bytes()

    g1, b1 = params["g1"], params["b1"]
    g2, b2 = params["g2"], params["b2"]
    wqkv = params["wqkv"].astype(bf16)
    wproj = params["wproj"].astype(bf16)
    w1 = params["w1"].astype(bf16)
    w2 = params["w2"].astype(bf16)
    bqkv, bproj, bf1, bf2 = (params["bqkv"], params["bproj"],
                             params["bf1"], params["bf2"])

    # --------------- kernel 1: LN1 + qkv projection ---------------
    nN = N // tn
    n3 = (3 * C) // tc3
    qkv = pl.pallas_call(
        _ln_qkv_kernel,
        out_shape=jax.ShapeDtypeStruct((B, N, 3 * C), bf16),
        grid=(B, nN, n3),
        in_specs=[
            pl.BlockSpec((1, tn, C), lambda b, i, j: (b, i, 0)),   # x
            pl.BlockSpec((1, C), lambda b, i, j: (0, 0)),          # gamma1
            pl.BlockSpec((1, C), lambda b, i, j: (0, 0)),          # beta1
            pl.BlockSpec((C, tc3), lambda b, i, j: (0, j)),        # Wqkv column tile
            pl.BlockSpec((1, tc3), lambda b, i, j: (0, j)),        # bqkv tile
        ],
        out_specs=pl.BlockSpec((1, tn, tc3), lambda b, i, j: (b, i, j)),
        scratch_shapes=[pltpu.VMEM((tn, C), bf16)],
        compiler_params=pltpu.CompilerParams(
            dimension_semantics=("parallel", "parallel", "arbitrary"),
            vmem_limit_bytes=vmem_limit),
        cost_estimate=pl.CostEstimate(
            flops=2 * B * N * C * 3 * C,
            transcendentals=0,
            bytes_accessed=B * N * C * 4 + C * 3 * C * 2 + B * N * 3 * C * 2),
    )(x, g1, b1, wqkv, bqkv)

    # Head-major layout for lane-aligned attention blocks: (B, H, N, D).
    qkv_h = qkv.reshape(B, N, 3, H, D).transpose(2, 0, 3, 1, 4)
    q, k, v = qkv_h[0], qkv_h[1], qkv_h[2]

    # --------------- kernel 2: flash attention ---------------
    nQ, nK = N // tq, N // tk
    attn = pl.pallas_call(
        functools.partial(_flash_attn_kernel, scale),
        out_shape=jax.ShapeDtypeStruct((B, H, N, D), bf16),
        grid=(B, H, nQ, nK),
        in_specs=[
            pl.BlockSpec((1, 1, tq, D), lambda b, h, i, j: (b, h, i, 0)),
            pl.BlockSpec((1, 1, tk, D), lambda b, h, i, j: (b, h, j, 0)),
            pl.BlockSpec((1, 1, tk, D), lambda b, h, i, j: (b, h, j, 0)),
        ],
        out_specs=pl.BlockSpec((1, 1, tq, D), lambda b, h, i, j: (b, h, i, 0)),
        scratch_shapes=[pltpu.VMEM((tq, 1), f32),
                        pltpu.VMEM((tq, 1), f32),
                        pltpu.VMEM((tq, D), f32)],
        compiler_params=pltpu.CompilerParams(
            dimension_semantics=("parallel", "parallel", "parallel", "arbitrary"),
            vmem_limit_bytes=vmem_limit),
        cost_estimate=pl.CostEstimate(
            flops=4 * B * H * N * N * D,
            transcendentals=B * H * N * N,
            bytes_accessed=4 * B * H * N * D * 2),
    )(q, k, v)

    attn = attn.transpose(0, 2, 1, 3).reshape(B, N, C)             # back to (B, N, C)

    # --------------- kernel 3: proj + residual + LN2 + MLP ---------------
    nHid = hidden // th
    out = pl.pallas_call(
        _proj_mlp_kernel,
        out_shape=jax.ShapeDtypeStruct((B, N, C), x.dtype),
        grid=(B, nN, nHid),
        in_specs=[
            pl.BlockSpec((1, tn, C), lambda b, i, j: (b, i, 0)),   # x (residual)
            pl.BlockSpec((1, tn, C), lambda b, i, j: (b, i, 0)),   # attention out
            pl.BlockSpec((C, C), lambda b, i, j: (0, 0)),          # Wproj
            pl.BlockSpec((1, C), lambda b, i, j: (0, 0)),          # bproj
            pl.BlockSpec((1, C), lambda b, i, j: (0, 0)),          # gamma2
            pl.BlockSpec((1, C), lambda b, i, j: (0, 0)),          # beta2
            pl.BlockSpec((C, th), lambda b, i, j: (0, j)),         # W1 column tile
            pl.BlockSpec((1, th), lambda b, i, j: (0, j)),         # b1 tile
            pl.BlockSpec((th, C), lambda b, i, j: (j, 0)),         # W2 row tile
            pl.BlockSpec((1, C), lambda b, i, j: (0, 0)),          # b2 (fc2 bias)
        ],
        out_specs=pl.BlockSpec((1, tn, C), lambda b, i, j: (b, i, 0)),
        scratch_shapes=[pltpu.VMEM((tn, C), f32),                  # x1
                        pltpu.VMEM((tn, C), bf16),                 # LN2(x1)
                        pltpu.VMEM((tn, C), f32)],                 # fc2 accumulator
        compiler_params=pltpu.CompilerParams(
            dimension_semantics=("parallel", "parallel", "arbitrary"),
            vmem_limit_bytes=vmem_limit),
        cost_estimate=pl.CostEstimate(
            flops=2 * B * N * (C * C + 2 * C * hidden),
            transcendentals=B * N * hidden,
            bytes_accessed=(B * N * C * (4 + 2 + 4)
                            + (C * C + 2 * C * hidden) * 2)),
    )(x, attn, wproj, bproj, g2, b2, w1, bf1, w2, bf2)

    return out


vit_block = jax.jit(_vit_block_impl, static_argnums=(2,))


# --------------------------- reference & params -----------------------------

def vit_block_reference(x, params, num_heads):
    """Pure-JAX f32 reference matching the PyTorch module."""
    B, N, C = x.shape
    H = num_heads
    D = C // H

    def ln(v, g, b):
        mu = jnp.mean(v, axis=-1, keepdims=True)
        var = jnp.mean((v - mu) ** 2, axis=-1, keepdims=True)
        return (v - mu) * jax.lax.rsqrt(var + _EPS) * g + b

    y = ln(x, params["g1"], params["b1"])
    qkv = y @ params["wqkv"] + params["bqkv"]
    qkv = qkv.reshape(B, N, 3, H, D).transpose(2, 0, 3, 1, 4)
    q, k, v = qkv[0], qkv[1], qkv[2]
    s = jnp.einsum("bhqd,bhkd->bhqk", q, k) * (D ** -0.5)
    p = jax.nn.softmax(s, axis=-1)
    o = jnp.einsum("bhqk,bhkd->bhqd", p, v).transpose(0, 2, 1, 3).reshape(B, N, C)
    x1 = x + (o @ params["wproj"] + params["bproj"])
    y2 = ln(x1, params["g2"], params["b2"])
    h = y2 @ params["w1"] + params["bf1"]
    h = 0.5 * h * (1.0 + jax.lax.erf(h / jnp.sqrt(2.0)))
    return x1 + (h @ params["w2"] + params["bf2"])


def init_params(key, embed_dim, num_heads, mlp_ratio):
    hidden = int(embed_dim * mlp_ratio)
    ks = jax.random.split(key, 8)
    std = 0.02
    f32 = jnp.float32
    return {
        "g1": jnp.ones((1, embed_dim), f32),
        "b1": jnp.zeros((1, embed_dim), f32),
        "g2": jnp.ones((1, embed_dim), f32),
        "b2": jnp.zeros((1, embed_dim), f32),
        # nn.Linear weights pre-transposed to (in_features, out_features)
        "wqkv": std * jax.random.normal(ks[0], (embed_dim, 3 * embed_dim), f32),
        "bqkv": std * jax.random.normal(ks[1], (1, 3 * embed_dim), f32),
        "wproj": std * jax.random.normal(ks[2], (embed_dim, embed_dim), f32),
        "bproj": std * jax.random.normal(ks[3], (1, embed_dim), f32),
        "w1": std * jax.random.normal(ks[4], (embed_dim, hidden), f32),
        "bf1": std * jax.random.normal(ks[5], (1, hidden), f32),
        "w2": std * jax.random.normal(ks[6], (hidden, embed_dim), f32),
        "bf2": std * jax.random.normal(ks[7], (1, embed_dim), f32),
    }


if __name__ == "__main__":
    B, N, C = 2, 8, 32          # batch, tokens, embed_dim
    num_heads = 4
    mlp_ratio = 4.0

    key = jax.random.PRNGKey(0)
    kx, kp = jax.random.split(key)
    x = jax.random.normal(kx, (B, N, C), jnp.float32)
    params = init_params(kp, C, num_heads, mlp_ratio)

    out = vit_block(x, params, num_heads)
    jax.block_until_ready(out)

    assert out.shape == (B, N, C) and out.dtype == jnp.float32
    ref = vit_block_reference(x, params, num_heads)
    max_err = float(jnp.max(jnp.abs(out - ref)))
    assert max_err < 5e-2, f"max abs error vs reference: {max_err}"
    print("KERNEL_OK")
</pallas_src>

<mosaic_0001>
module attributes {stable_mosaic.version = 11 : i64} {
  func.func @_ln_qkv_kernel(%arg0: i32, %arg1: i32, %arg2: i32, %arg3: memref<1x8x32xf32, #tpu.memory_space<vmem>>, %arg4: memref<1x32xf32, #tpu.memory_space<vmem>>, %arg5: memref<1x32xf32, #tpu.memory_space<vmem>>, %arg6: memref<32x96xbf16, #tpu.memory_space<vmem>>, %arg7: memref<1x96xf32, #tpu.memory_space<vmem>>, %arg8: memref<1x8x96xbf16, #tpu.memory_space<vmem>>, %arg9: memref<8x32xbf16, #tpu.memory_space<vmem>>) attributes {dimension_semantics = [#tpu.dimension_semantics<parallel>, #tpu.dimension_semantics<parallel>, #tpu.dimension_semantics<arbitrary>], iteration_bounds = array<i64: 2, 1, 1>, scalar_prefetch = 0 : i64, scratch_operands = 1 : i64, tpu.core_type = #tpu.core_type<tc>, window_params = [{transform_indices = @transform_0, window_bounds = array<i64: 1, 8, 32>}, {pipeline_mode = #tpu.pipeline_mode<synchronous>, transform_indices = @transform_1, window_bounds = array<i64: 1, 32>}, {pipeline_mode = #tpu.pipeline_mode<synchronous>, transform_indices = @transform_2, window_bounds = array<i64: 1, 32>}, {transform_indices = @transform_3, window_bounds = array<i64: 32, 96>}, {transform_indices = @transform_4, window_bounds = array<i64: 1, 96>}, {transform_indices = @transform_5, window_bounds = array<i64: 1, 8, 96>}]} {
    %c0_i32 = arith.constant 0 : i32
    %0 = arith.cmpi eq, %arg2, %c0_i32 : i32
    %1 = arith.extui %0 : i1 to i32
    %c0_i32_0 = arith.constant 0 : i32
    %2 = arith.cmpi ne, %1, %c0_i32_0 : i32
    scf.if %2 {
      %c0_9 = arith.constant 0 : index
      %c0_10 = arith.constant 0 : index
      %c0_11 = arith.constant 0 : index
      %13 = vector.load %arg3[%c0_9, %c0_10, %c0_11] : memref<1x8x32xf32, #tpu.memory_space<vmem>>, vector<1x8x32xf32>
      %14 = vector.shape_cast %13 : vector<1x8x32xf32> to vector<8x32xf32>
      %c0_12 = arith.constant 0 : index
      %c0_13 = arith.constant 0 : index
      %15 = vector.load %arg4[%c0_12, %c0_13] : memref<1x32xf32, #tpu.memory_space<vmem>>, vector<1x32xf32>
      %c0_14 = arith.constant 0 : index
      %c0_15 = arith.constant 0 : index
      %16 = vector.load %arg5[%c0_14, %c0_15] : memref<1x32xf32, #tpu.memory_space<vmem>>, vector<1x32xf32>
      %cst_16 = arith.constant dense<0.000000e+00> : vector<8xf32>
      %17 = vector.multi_reduction <add>, %14, %cst_16 [1] : vector<8x32xf32> to vector<8xf32>
      %18 = vector.shape_cast %17 : vector<8xf32> to vector<8x1xf32>
      %cst_17 = arith.constant 3.200000e+01 : f32
      %19 = vector.broadcast %cst_17 : f32 to vector<8x1xf32>
      %20 = arith.divf %18, %19 : vector<8x1xf32>
      %21 = vector.broadcast %20 : vector<8x1xf32> to vector<8x32xf32>
      %22 = arith.subf %14, %21 : vector<8x32xf32>
      %23 = arith.mulf %22, %22 : vector<8x32xf32>
      %cst_18 = arith.constant dense<0.000000e+00> : vector<8xf32>
      %24 = vector.multi_reduction <add>, %23, %cst_18 [1] : vector<8x32xf32> to vector<8xf32>
      %25 = vector.shape_cast %24 : vector<8xf32> to vector<8x1xf32>
      %cst_19 = arith.constant 3.200000e+01 : f32
      %26 = vector.broadcast %cst_19 : f32 to vector<8x1xf32>
      %27 = arith.divf %25, %26 : vector<8x1xf32>
      %cst_20 = arith.constant 9.99999997E-7 : f32
      %28 = vector.broadcast %cst_20 : f32 to vector<8x1xf32>
      %29 = arith.addf %27, %28 : vector<8x1xf32>
      %30 = math.rsqrt %29 : vector<8x1xf32>
      %31 = vector.broadcast %30 : vector<8x1xf32> to vector<8x32xf32>
      %32 = arith.mulf %22, %31 : vector<8x32xf32>
      %33 = vector.broadcast %15 : vector<1x32xf32> to vector<8x32xf32>
      %34 = arith.mulf %32, %33 : vector<8x32xf32>
      %35 = vector.broadcast %16 : vector<1x32xf32> to vector<8x32xf32>
      %36 = arith.addf %34, %35 : vector<8x32xf32>
      %37 = arith.truncf %36 : vector<8x32xf32> to vector<8x32xbf16>
      %c0_21 = arith.constant 0 : index
      %c0_22 = arith.constant 0 : index
      %38 = vector.load %arg9[%c0_21, %c0_22] : memref<8x32xbf16, #tpu.memory_space<vmem>>, vector<8x32xbf16>
      tpu.vector_store %arg9[%c0_21, %c0_22], %37 {strides = array<i32>} : memref<8x32xbf16, #tpu.memory_space<vmem>>, vector<8x32xbf16>,
    } else {
    }
    %c0 = arith.constant 0 : index
    %c0_1 = arith.constant 0 : index
    %3 = vector.load %arg9[%c0, %c0_1] : memref<8x32xbf16, #tpu.memory_space<vmem>>, vector<8x32xbf16>
    %c0_2 = arith.constant 0 : index
    %c0_3 = arith.constant 0 : index
    %4 = vector.load %arg6[%c0_2, %c0_3] : memref<32x96xbf16, #tpu.memory_space<vmem>>, vector<32x96xbf16>
    %cst = arith.constant dense<0.000000e+00> : vector<8x96xf32>
    %5 = tpu.matmul %3, %4, %cst {dimension_numbers = #tpu.dot_dimension_numbers<[1], [0], [0], [1], [0, 0, 1, 1], [], []>} : vector<8x32xbf16>, vector<32x96xbf16>, vector<8x96xf32> -> vector<8x96xf32>
    %c0_4 = arith.constant 0 : index
    %c0_5 = arith.constant 0 : index
    %6 = vector.load %arg7[%c0_4, %c0_5] : memref<1x96xf32, #tpu.memory_space<vmem>>, vector<1x96xf32>
    %7 = vector.broadcast %6 : vector<1x96xf32> to vector<8x96xf32>
    %8 = arith.addf %5, %7 : vector<8x96xf32>
    %9 = arith.truncf %8 : vector<8x96xf32> to vector<8x96xbf16>
    %c0_6 = arith.constant 0 : index
    %c0_7 = arith.constant 0 : index
    %c0_8 = arith.constant 0 : index
    %10 = vector.load %arg8[%c0_6, %c0_7, %c0_8] : memref<1x8x96xbf16, #tpu.memory_space<vmem>>, vector<1x8x96xbf16>
    %11 = vector.shape_cast %10 : vector<1x8x96xbf16> to vector<8x96xbf16>
    %12 = vector.shape_cast %9 : vector<8x96xbf16> to vector<1x8x96xbf16>
    tpu.vector_store %arg8[%c0_6, %c0_7, %c0_8], %12 {strides = array<i32>} : memref<1x8x96xbf16, #tpu.memory_space<vmem>>, vector<1x8x96xbf16>,
    return
  }
  func.func @transform_0(%arg0: i32, %arg1: i32, %arg2: i32) -> (i32, i32, i32) {
    %c0_i32 = arith.constant 0 : i32
    %c0_i32_0 = arith.constant 0 : i32
    return %arg0, %arg1, %c0_i32 : i32, i32, i32
  }
  func.func @transform_1(%arg0: i32, %arg1: i32, %arg2: i32) -> (i32, i32) {
    %c0_i32 = arith.constant 0 : i32
    %c0_i32_0 = arith.constant 0 : i32
    %c0_i32_1 = arith.constant 0 : i32
    return %c0_i32, %c0_i32_0 : i32, i32
  }
  func.func @transform_2(%arg0: i32, %arg1: i32, %arg2: i32) -> (i32, i32) {
    %c0_i32 = arith.constant 0 : i32
    %c0_i32_0 = arith.constant 0 : i32
    %c0_i32_1 = arith.constant 0 : i32
    return %c0_i32, %c0_i32_0 : i32, i32
  }
  func.func @transform_3(%arg0: i32, %arg1: i32, %arg2: i32) -> (i32, i32) {
    %c0_i32 = arith.constant 0 : i32
    %c0_i32_0 = arith.constant 0 : i32
    return %c0_i32, %arg2 : i32, i32
  }
  func.func @transform_4(%arg0: i32, %arg1: i32, %arg2: i32) -> (i32, i32) {
    %c0_i32 = arith.constant 0 : i32
    %c0_i32_0 = arith.constant 0 : i32
    return %c0_i32, %arg2 : i32, i32
  }
  func.func @transform_5(%arg0: i32, %arg1: i32, %arg2: i32) -> (i32, i32, i32) {
    %c0_i32 = arith.constant 0 : i32
    return %arg0, %arg1, %arg2 : i32, i32, i32
  }
}

module attributes {stable_mosaic.version = 11 : i64} {
  func.func @_flash_attn_kernel(%arg0: i32, %arg1: i32, %arg2: i32, %arg3: i32, %arg4: memref<1x1x8x8xbf16, #tpu.memory_space<vmem>>, %arg5: memref<1x1x8x8xbf16, #tpu.memory_space<vmem>>, %arg6: memref<1x1x8x8xbf16, #tpu.memory_space<vmem>>, %arg7: memref<1x1x8x8xbf16, #tpu.memory_space<vmem>>, %arg8: memref<8x1xf32, #tpu.memory_space<vmem>>, %arg9: memref<8x1xf32, #tpu.memory_space<vmem>>, %arg10: memref<8x8xf32, #tpu.memory_space<vmem>>) attributes {dimension_semantics = [#tpu.dimension_semantics<parallel>, #tpu.dimension_semantics<parallel>, #tpu.dimension_semantics<parallel>, #tpu.dimension_semantics<arbitrary>], iteration_bounds = array<i64: 2, 4, 1, 1>, scalar_prefetch = 0 : i64, scratch_operands = 3 : i64, tpu.core_type = #tpu.core_type<tc>, window_params = [{transform_indices = @transform_0, window_bounds = array<i64: 1, 1, 8, 8>}, {transform_indices = @transform_1, window_bounds = array<i64: 1, 1, 8, 8>}, {transform_indices = @transform_2, window_bounds = array<i64: 1, 1, 8, 8>}, {transform_indices = @transform_3, window_bounds = array<i64: 1, 1, 8, 8>}]} {
    %c0_i32 = arith.constant 0 : i32
    %0 = arith.cmpi eq, %arg3, %c0_i32 : i32
    %1 = arith.extui %0 : i1 to i32
    %c0_i32_0 = arith.constant 0 : i32
    %2 = arith.cmpi ne, %1, %c0_i32_0 : i32
    scf.if %2 {
      %cst_30 = arith.constant 0xFF800000 : f32
      %38 = vector.broadcast %cst_30 : f32 to vector<8x1xf32>
      %c0_31 = arith.constant 0 : index
      %c0_32 = arith.constant 0 : index
      %39 = vector.load %arg8[%c0_31, %c0_32] : memref<8x1xf32, #tpu.memory_space<vmem>>, vector<8x1xf32>
      tpu.vector_store %arg8[%c0_31, %c0_32], %38 {strides = array<i32>} : memref<8x1xf32, #tpu.memory_space<vmem>>, vector<8x1xf32>,
      %cst_33 = arith.constant 0.000000e+00 : f32
      %40 = vector.broadcast %cst_33 : f32 to vector<8x1xf32>
      %c0_34 = arith.constant 0 : index
      %c0_35 = arith.constant 0 : index
      %41 = vector.load %arg9[%c0_34, %c0_35] : memref<8x1xf32, #tpu.memory_space<vmem>>, vector<8x1xf32>
      tpu.vector_store %arg9[%c0_34, %c0_35], %40 {strides = array<i32>} : memref<8x1xf32, #tpu.memory_space<vmem>>, vector<8x1xf32>,
      %cst_36 = arith.constant 0.000000e+00 : f32
      %42 = vector.broadcast %cst_36 : f32 to vector<8x8xf32>
      %c0_37 = arith.constant 0 : index
      %c0_38 = arith.constant 0 : index
      %43 = vector.load %arg10[%c0_37, %c0_38] : memref<8x8xf32, #tpu.memory_space<vmem>>, vector<8x8xf32>
      tpu.vector_store %arg10[%c0_37, %c0_38], %42 {strides = array<i32>} : memref<8x8xf32, #tpu.memory_space<vmem>>, vector<8x8xf32>,
    } else {
    }
    %c0 = arith.constant 0 : index
    %c0_1 = arith.constant 0 : index
    %c0_2 = arith.constant 0 : index
    %c0_3 = arith.constant 0 : index
    %3 = vector.load %arg4[%c0, %c0_1, %c0_2, %c0_3] : memref<1x1x8x8xbf16, #tpu.memory_space<vmem>>, vector<1x1x8x8xbf16>
    %4 = vector.shape_cast %3 : vector<1x1x8x8xbf16> to vector<8x8xbf16>
    %c0_4 = arith.constant 0 : index
    %c0_5 = arith.constant 0 : index
    %c0_6 = arith.constant 0 : index
    %c0_7 = arith.constant 0 : index
    %5 = vector.load %arg5[%c0_4, %c0_5, %c0_6, %c0_7] : memref<1x1x8x8xbf16, #tpu.memory_space<vmem>>, vector<1x1x8x8xbf16>
    %6 = vector.shape_cast %5 : vector<1x1x8x8xbf16> to vector<8x8xbf16>
    %c0_8 = arith.constant 0 : index
    %c0_9 = arith.constant 0 : index
    %c0_10 = arith.constant 0 : index
    %c0_11 = arith.constant 0 : index
    %7 = vector.load %arg6[%c0_8, %c0_9, %c0_10, %c0_11] : memref<1x1x8x8xbf16, #tpu.memory_space<vmem>>, vector<1x1x8x8xbf16>
    %8 = vector.shape_cast %7 : vector<1x1x8x8xbf16> to vector<8x8xbf16>
    %cst = arith.constant dense<0.000000e+00> : vector<8x8xf32>
    %9 = tpu.matmul %4, %6, %cst {dimension_numbers = #tpu.dot_dimension_numbers<[1], [1], [0], [0], [0, 0, 1, 0], [], []>} : vector<8x8xbf16>, vector<8x8xbf16>, vector<8x8xf32> -> vector<8x8xf32>
    %cst_12 = arith.constant 0.353553385 : f32
    %10 = vector.broadcast %cst_12 : f32 to vector<8x8xf32>
    %11 = arith.mulf %9, %10 : vector<8x8xf32>
    %c0_13 = arith.constant 0 : index
    %c0_14 = arith.constant 0 : index
    %12 = vector.load %arg8[%c0_13, %c0_14] : memref<8x1xf32, #tpu.memory_space<vmem>>, vector<8x1xf32>
    %cst_15 = arith.constant dense<0xFF800000> : vector<8xf32>
    %13 = vector.multi_reduction <maximumf>, %11, %cst_15 [1] : vector<8x8xf32> to vector<8xf32>
    %14 = vector.shape_cast %13 : vector<8xf32> to vector<8x1xf32>
    %15 = arith.maximumf %12, %14 : vector<8x1xf32>
    %16 = arith.subf %12, %15 : vector<8x1xf32>
    %17 = math.exp %16 : vector<8x1xf32>
    %18 = vector.broadcast %15 : vector<8x1xf32> to vector<8x8xf32>
    %19 = arith.subf %11, %18 : vector<8x8xf32>
    %20 = math.exp %19 : vector<8x8xf32>
    %c0_16 = arith.constant 0 : index
    %c0_17 = arith.constant 0 : index
    %21 = vector.load %arg9[%c0_16, %c0_17] : memref<8x1xf32, #tpu.memory_space<vmem>>, vector<8x1xf32>
    %22 = arith.mulf %17, %21 : vector<8x1xf32>
    %cst_18 = arith.constant dense<0.000000e+00> : vector<8xf32>
    %23 = vector.multi_reduction <add>, %20, %cst_18 [1] : vector<8x8xf32> to vector<8xf32>
    %24 = vector.shape_cast %23 : vector<8xf32> to vector<8x1xf32>
    %25 = arith.addf %22, %24 : vector<8x1xf32>
    %c0_19 = arith.constant 0 : index
    %c0_20 = arith.constant 0 : index
    %26 = vector.load %arg9[%c0_19, %c0_20] : memref<8x1xf32, #tpu.memory_space<vmem>>, vector<8x1xf32>
    tpu.vector_store %arg9[%c0_19, %c0_20], %25 {strides = array<i32>} : memref<8x1xf32, #tpu.memory_space<vmem>>, vector<8x1xf32>,
    %c0_21 = arith.constant 0 : index
    %c0_22 = arith.constant 0 : index
    %27 = vector.load %arg10[%c0_21, %c0_22] : memref<8x8xf32, #tpu.memory_space<vmem>>, vector<8x8xf32>
    %28 = vector.broadcast %17 : vector<8x1xf32> to vector<8x8xf32>
    %29 = arith.mulf %28, %27 : vector<8x8xf32>
    %30 = arith.truncf %20 : vector<8x8xf32> to vector<8x8xbf16>
    %cst_23 = arith.constant dense<0.000000e+00> : vector<8x8xf32>
    %31 = tpu.matmul %30, %8, %cst_23 {dimension_numbers = #tpu.dot_dimension_numbers<[1], [0], [0], [1], [0, 0, 1, 1], [], []>} : vector<8x8xbf16>, vector<8x8xbf16>, vector<8x8xf32> -> vector<8x8xf32>
    %32 = arith.addf %29, %31 : vector<8x8xf32>
    %c0_24 = arith.constant 0 : index
    %c0_25 = arith.constant 0 : index
    %33 = vector.load %arg10[%c0_24, %c0_25] : memref<8x8xf32, #tpu.memory_space<vmem>>, vector<8x8xf32>
    tpu.vector_store %arg10[%c0_24, %c0_25], %32 {strides = array<i32>} : memref<8x8xf32, #tpu.memory_space<vmem>>, vector<8x8xf32>,
    %c0_26 = arith.constant 0 : index
    %c0_27 = arith.constant 0 : index
    %34 = vector.load %arg8[%c0_26, %c0_27] : memref<8x1xf32, #tpu.memory_space<vmem>>, vector<8x1xf32>
    tpu.vector_store %arg8[%c0_26, %c0_27], %15 {strides = array<i32>} : memref<8x1xf32, #tpu.memory_space<vmem>>, vector<8x1xf32>,
    %c0_i32_28 = arith.constant 0 : i32
    %35 = arith.cmpi eq, %arg3, %c0_i32_28 : i32
    %36 = arith.extui %35 : i1 to i32
    %c0_i32_29 = arith.constant 0 : i32
    %37 = arith.cmpi ne, %36, %c0_i32_29 : i32
    scf.if %37 {
      %c0_30 = arith.constant 0 : index
      %c0_31 = arith.constant 0 : index
      %38 = vector.load %arg9[%c0_30, %c0_31] : memref<8x1xf32, #tpu.memory_space<vmem>>, vector<8x1xf32>
      %39 = tpu.reciprocal %38 {approx = true} : vector<8x1xf32> -> vector<8x1xf32>
      %c0_32 = arith.constant 0 : index
      %c0_33 = arith.constant 0 : index
      %40 = vector.load %arg10[%c0_32, %c0_33] : memref<8x8xf32, #tpu.memory_space<vmem>>, vector<8x8xf32>
      %41 = vector.broadcast %39 : vector<8x1xf32> to vector<8x8xf32>
      %42 = arith.mulf %40, %41 : vector<8x8xf32>
      %43 = arith.truncf %42 : vector<8x8xf32> to vector<8x8xbf16>
      %c0_34 = arith.constant 0 : index
      %c0_35 = arith.constant 0 : index
      %c0_36 = arith.constant 0 : index
      %c0_37 = arith.constant 0 : index
      %44 = vector.load %arg7[%c0_34, %c0_35, %c0_36, %c0_37] : memref<1x1x8x8xbf16, #tpu.memory_space<vmem>>, vector<1x1x8x8xbf16>
      %45 = vector.shape_cast %44 : vector<1x1x8x8xbf16> to vector<8x8xbf16>
      %46 = vector.shape_cast %43 : vector<8x8xbf16> to vector<1x1x8x8xbf16>
      tpu.vector_store %arg7[%c0_34, %c0_35, %c0_36, %c0_37], %46 {strides = array<i32>} : memref<1x1x8x8xbf16, #tpu.memory_space<vmem>>, vector<1x1x8x8xbf16>,
    } else {
    }
    return
  }
  func.func @transform_0(%arg0: i32, %arg1: i32, %arg2: i32, %arg3: i32) -> (i32, i32, i32, i32) {
    %c0_i32 = arith.constant 0 : i32
    %c0_i32_0 = arith.constant 0 : i32
    return %arg0, %arg1, %arg2, %c0_i32 : i32, i32, i32, i32
  }
  func.func @transform_1(%arg0: i32, %arg1: i32, %arg2: i32, %arg3: i32) -> (i32, i32, i32, i32) {
    %c0_i32 = arith.constant 0 : i32
    %c0_i32_0 = arith.constant 0 : i32
    return %arg0, %arg1, %arg3, %c0_i32 : i32, i32, i32, i32
  }
  func.func @transform_2(%arg0: i32, %arg1: i32, %arg2: i32, %arg3: i32) -> (i32, i32, i32, i32) {
    %c0_i32 = arith.constant 0 : i32
    %c0_i32_0 = arith.constant 0 : i32
    return %arg0, %arg1, %arg3, %c0_i32 : i32, i32, i32, i32
  }
  func.func @transform_3(%arg0: i32, %arg1: i32, %arg2: i32, %arg3: i32) -> (i32, i32, i32, i32) {
    %c0_i32 = arith.constant 0 : i32
    %c0_i32_0 = arith.constant 0 : i32
    return %arg0, %arg1, %arg2, %c0_i32 : i32, i32, i32, i32
  }
}

module attributes {stable_mosaic.version = 11 : i64} {
  func.func @_proj_mlp_kernel(%arg0: i32, %arg1: i32, %arg2: i32, %arg3: memref<1x8x32xf32, #tpu.memory_space<vmem>>, %arg4: memref<1x8x32xbf16, #tpu.memory_space<vmem>>, %arg5: memref<32x32xbf16, #tpu.memory_space<vmem>>, %arg6: memref<1x32xf32, #tpu.memory_space<vmem>>, %arg7: memref<1x32xf32, #tpu.memory_space<vmem>>, %arg8: memref<1x32xf32, #tpu.memory_space<vmem>>, %arg9: memref<32x128xbf16, #tpu.memory_space<vmem>>, %arg10: memref<1x128xf32, #tpu.memory_space<vmem>>, %arg11: memref<128x32xbf16, #tpu.memory_space<vmem>>, %arg12: memref<1x32xf32, #tpu.memory_space<vmem>>, %arg13: memref<1x8x32xf32, #tpu.memory_space<vmem>>, %arg14: memref<8x32xf32, #tpu.memory_space<vmem>>, %arg15: memref<8x32xbf16, #tpu.memory_space<vmem>>, %arg16: memref<8x32xf32, #tpu.memory_space<vmem>>) attributes {dimension_semantics = [#tpu.dimension_semantics<parallel>, #tpu.dimension_semantics<parallel>, #tpu.dimension_semantics<arbitrary>], iteration_bounds = array<i64: 2, 1, 1>, scalar_prefetch = 0 : i64, scratch_operands = 3 : i64, tpu.core_type = #tpu.core_type<tc>, window_params = [{transform_indices = @transform_0, window_bounds = array<i64: 1, 8, 32>}, {transform_indices = @transform_1, window_bounds = array<i64: 1, 8, 32>}, {pipeline_mode = #tpu.pipeline_mode<synchronous>, transform_indices = @transform_2, window_bounds = array<i64: 32, 32>}, {pipeline_mode = #tpu.pipeline_mode<synchronous>, transform_indices = @transform_3, window_bounds = array<i64: 1, 32>}, {pipeline_mode = #tpu.pipeline_mode<synchronous>, transform_indices = @transform_4, window_bounds = array<i64: 1, 32>}, {pipeline_mode = #tpu.pipeline_mode<synchronous>, transform_indices = @transform_5, window_bounds = array<i64: 1, 32>}, {transform_indices = @transform_6, window_bounds = array<i64: 32, 128>}, {transform_indices = @transform_7, window_bounds = array<i64: 1, 128>}, {transform_indices = @transform_8, window_bounds = array<i64: 128, 32>}, {pipeline_mode = #tpu.pipeline_mode<synchronous>, transform_indices = @transform_9, window_bounds = array<i64: 1, 32>}, {transform_indices = @transform_10, window_bounds = array<i64: 1, 8, 32>}]} {
    %c0_i32 = arith.constant 0 : i32
    %0 = arith.cmpi eq, %arg2, %c0_i32 : i32
    %1 = arith.extui %0 : i1 to i32
    %c0_i32_0 = arith.constant 0 : i32
    %2 = arith.cmpi ne, %1, %c0_i32_0 : i32
    scf.if %2 {
      %c0_30 = arith.constant 0 : index
      %c0_31 = arith.constant 0 : index
      %c0_32 = arith.constant 0 : index
      %58 = vector.load %arg4[%c0_30, %c0_31, %c0_32] : memref<1x8x32xbf16, #tpu.memory_space<vmem>>, vector<1x8x32xbf16>
      %59 = vector.shape_cast %58 : vector<1x8x32xbf16> to vector<8x32xbf16>
      %c0_33 = arith.constant 0 : index
      %c0_34 = arith.constant 0 : index
      %60 = vector.load %arg5[%c0_33, %c0_34] : memref<32x32xbf16, #tpu.memory_space<vmem>>, vector<32x32xbf16>
      %cst_35 = arith.constant dense<0.000000e+00> : vector<8x32xf32>
      %61 = tpu.matmul %59, %60, %cst_35 {dimension_numbers = #tpu.dot_dimension_numbers<[1], [0], [0], [1], [0, 0, 1, 1], [], []>} : vector<8x32xbf16>, vector<32x32xbf16>, vector<8x32xf32> -> vector<8x32xf32>
      %c0_36 = arith.constant 0 : index
      %c0_37 = arith.constant 0 : index
      %62 = vector.load %arg6[%c0_36, %c0_37] : memref<1x32xf32, #tpu.memory_space<vmem>>, vector<1x32xf32>
      %63 = vector.broadcast %62 : vector<1x32xf32> to vector<8x32xf32>
      %64 = arith.addf %61, %63 : vector<8x32xf32>
      %c0_38 = arith.constant 0 : index
      %c0_39 = arith.constant 0 : index
      %c0_40 = arith.constant 0 : index
      %65 = vector.load %arg3[%c0_38, %c0_39, %c0_40] : memref<1x8x32xf32, #tpu.memory_space<vmem>>, vector<1x8x32xf32>
      %66 = vector.shape_cast %65 : vector<1x8x32xf32> to vector<8x32xf32>
      %67 = arith.addf %66, %64 : vector<8x32xf32>
      %c0_41 = arith.constant 0 : index
      %c0_42 = arith.constant 0 : index
      %68 = vector.load %arg14[%c0_41, %c0_42] : memref<8x32xf32, #tpu.memory_space<vmem>>, vector<8x32xf32>
      tpu.vector_store %arg14[%c0_41, %c0_42], %67 {strides = array<i32>} : memref<8x32xf32, #tpu.memory_space<vmem>>, vector<8x32xf32>,
      %c0_43 = arith.constant 0 : index
      %c0_44 = arith.constant 0 : index
      %69 = vector.load %arg7[%c0_43, %c0_44] : memref<1x32xf32, #tpu.memory_space<vmem>>, vector<1x32xf32>
      %c0_45 = arith.constant 0 : index
      %c0_46 = arith.constant 0 : index
      %70 = vector.load %arg8[%c0_45, %c0_46] : memref<1x32xf32, #tpu.memory_space<vmem>>, vector<1x32xf32>
      %cst_47 = arith.constant dense<0.000000e+00> : vector<8xf32>
      %71 = vector.multi_reduction <add>, %67, %cst_47 [1] : vector<8x32xf32> to vector<8xf32>
      %72 = vector.shape_cast %71 : vector<8xf32> to vector<8x1xf32>
      %cst_48 = arith.constant 3.200000e+01 : f32
      %73 = vector.broadcast %cst_48 : f32 to vector<8x1xf32>
      %74 = arith.divf %72, %73 : vector<8x1xf32>
      %75 = vector.broadcast %74 : vector<8x1xf32> to vector<8x32xf32>
      %76 = arith.subf %67, %75 : vector<8x32xf32>
      %77 = arith.mulf %76, %76 : vector<8x32xf32>
      %cst_49 = arith.constant dense<0.000000e+00> : vector<8xf32>
      %78 = vector.multi_reduction <add>, %77, %cst_49 [1] : vector<8x32xf32> to vector<8xf32>
      %79 = vector.shape_cast %78 : vector<8xf32> to vector<8x1xf32>
      %cst_50 = arith.constant 3.200000e+01 : f32
      %80 = vector.broadcast %cst_50 : f32 to vector<8x1xf32>
      %81 = arith.divf %79, %80 : vector<8x1xf32>
      %cst_51 = arith.constant 9.99999997E-7 : f32
      %82 = vector.broadcast %cst_51 : f32 to vector<8x1xf32>
      %83 = arith.addf %81, %82 : vector<8x1xf32>
      %84 = math.rsqrt %83 : vector<8x1xf32>
      %85 = vector.broadcast %84 : vector<8x1xf32> to vector<8x32xf32>
      %86 = arith.mulf %76, %85 : vector<8x32xf32>
      %87 = vector.broadcast %69 : vector<1x32xf32> to vector<8x32xf32>
      %88 = arith.mulf %86, %87 : vector<8x32xf32>
      %89 = vector.broadcast %70 : vector<1x32xf32> to vector<8x32xf32>
      %90 = arith.addf %88, %89 : vector<8x32xf32>
      %91 = arith.truncf %90 : vector<8x32xf32> to vector<8x32xbf16>
      %c0_52 = arith.constant 0 : index
      %c0_53 = arith.constant 0 : index
      %92 = vector.load %arg15[%c0_52, %c0_53] : memref<8x32xbf16, #tpu.memory_space<vmem>>, vector<8x32xbf16>
      tpu.vector_store %arg15[%c0_52, %c0_53], %91 {strides = array<i32>} : memref<8x32xbf16, #tpu.memory_space<vmem>>, vector<8x32xbf16>,
      %cst_54 = arith.constant 0.000000e+00 : f32
      %93 = vector.broadcast %cst_54 : f32 to vector<8x32xf32>
      %c0_55 = arith.constant 0 : index
      %c0_56 = arith.constant 0 : index
      %94 = vector.load %arg16[%c0_55, %c0_56] : memref<8x32xf32, #tpu.memory_space<vmem>>, vector<8x32xf32>
      tpu.vector_store %arg16[%c0_55, %c0_56], %93 {strides = array<i32>} : memref<8x32xf32, #tpu.memory_space<vmem>>, vector<8x32xf32>,
    } else {
    }
    %c0 = arith.constant 0 : index
    %c0_1 = arith.constant 0 : index
    %3 = vector.load %arg15[%c0, %c0_1] : memref<8x32xbf16, #tpu.memory_space<vmem>>, vector<8x32xbf16>
    %c0_2 = arith.constant 0 : index
    %c0_3 = arith.constant 0 : index
    %4 = vector.load %arg9[%c0_2, %c0_3] : memref<32x128xbf16, #tpu.memory_space<vmem>>, vector<32x128xbf16>
    %cst = arith.constant dense<0.000000e+00> : vector<8x128xf32>
    %5 = tpu.matmul %3, %4, %cst {dimension_numbers = #tpu.dot_dimension_numbers<[1], [0], [0], [1], [0, 0, 1, 1], [], []>} : vector<8x32xbf16>, vector<32x128xbf16>, vector<8x128xf32> -> vector<8x128xf32>
    %c0_4 = arith.constant 0 : index
    %c0_5 = arith.constant 0 : index
    %6 = vector.load %arg10[%c0_4, %c0_5] : memref<1x128xf32, #tpu.memory_space<vmem>>, vector<1x128xf32>
    %7 = vector.broadcast %6 : vector<1x128xf32> to vector<8x128xf32>
    %8 = arith.addf %5, %7 : vector<8x128xf32>
    %cst_6 = arith.constant 5.000000e-01 : f32
    %9 = vector.broadcast %cst_6 : f32 to vector<8x128xf32>
    %10 = arith.mulf %9, %8 : vector<8x128xf32>
    %cst_7 = arith.constant 0.707106769 : f32
    %11 = vector.broadcast %cst_7 : f32 to vector<8x128xf32>
    %12 = arith.mulf %8, %11 : vector<8x128xf32>
    %13 = math.absf %12 : vector<8x128xf32>
    %cst_8 = arith.constant 0.327591091 : f32
    %14 = vector.broadcast %cst_8 : f32 to vector<8x128xf32>
    %15 = arith.mulf %14, %13 : vector<8x128xf32>
    %cst_9 = arith.constant 1.000000e+00 : f32
    %16 = vector.broadcast %cst_9 : f32 to vector<8x128xf32>
    %17 = arith.addf %16, %15 : vector<8x128xf32>
    %cst_10 = arith.constant 1.000000e+00 : f32
    %18 = vector.broadcast %cst_10 : f32 to vector<8x128xf32>
    %19 = arith.divf %18, %17 : vector<8x128xf32>
    %cst_11 = arith.constant 1.06140542 : f32
    %20 = vector.broadcast %cst_11 : f32 to vector<8x128xf32>
    %21 = arith.mulf %20, %19 : vector<8x128xf32>
    %cst_12 = arith.constant -1.45315206 : f32
    %22 = vector.broadcast %cst_12 : f32 to vector<8x128xf32>
    %23 = arith.addf %21, %22 : vector<8x128xf32>
    %24 = arith.mulf %23, %19 : vector<8x128xf32>
    %cst_13 = arith.constant 1.42141378 : f32
    %25 = vector.broadcast %cst_13 : f32 to vector<8x128xf32>
    %26 = arith.addf %24, %25 : vector<8x128xf32>
    %27 = arith.mulf %26, %19 : vector<8x128xf32>
    %cst_14 = arith.constant -0.284496725 : f32
    %28 = vector.broadcast %cst_14 : f32 to vector<8x128xf32>
    %29 = arith.addf %27, %28 : vector<8x128xf32>
    %30 = arith.mulf %29, %19 : vector<8x128xf32>
    %cst_15 = arith.constant 0.254829586 : f32
    %31 = vector.broadcast %cst_15 : f32 to vector<8x128xf32>
    %32 = arith.addf %30, %31 : vector<8x128xf32>
    %33 = arith.mulf %32, %19 : vector<8x128xf32>
    %cst_16 = arith.constant 0.000000e+00 : f32
    %34 = vector.broadcast %cst_16 : f32 to vector<8x128xf32>
    %35 = arith.subf %34, %13 : vector<8x128xf32>
    %36 = arith.mulf %35, %13 : vector<8x128xf32>
    %37 = math.exp %36 : vector<8x128xf32>
    %38 = arith.mulf %33, %37 : vector<8x128xf32>
    %cst_17 = arith.constant 1.000000e+00 : f32
    %39 = vector.broadcast %cst_17 : f32 to vector<8x128xf32>
    %40 = arith.subf %39, %38 : vector<8x128xf32>
    %cst_18 = arith.constant 0.000000e+00 : f32
    %41 = vector.broadcast %cst_18 : f32 to vector<8x128xf32>
    %42 = arith.cmpf oge, %12, %41 : vector<8x128xf32>
    %cst_19 = arith.constant 0.000000e+00 : f32
    %43 = vector.broadcast %cst_19 : f32 to vector<8x128xf32>
    %44 = arith.subf %43, %40 : vector<8x128xf32>
    %45 = arith.select %42, %40, %44 : vector<8x128xi1>, vector<8x128xf32>
    %cst_20 = arith.constant 1.000000e+00 : f32
    %46 = vector.broadcast %cst_20 : f32 to vector<8x128xf32>
    %47 = arith.addf %46, %45 : vector<8x128xf32>
    %48 = arith.mulf %10, %47 : vector<8x128xf32>
    %c0_21 = arith.constant 0 : index
    %c0_22 = arith.constant 0 : index
    %49 = vector.load %arg16[%c0_21, %c0_22] : memref<8x32xf32, #tpu.memory_space<vmem>>, vector<8x32xf32>
    %50 = arith.truncf %48 : vector<8x128xf32> to vector<8x128xbf16>
    %c0_23 = arith.constant 0 : index
    %c0_24 = arith.constant 0 : index
    %51 = vector.load %arg11[%c0_23, %c0_24] : memref<128x32xbf16, #tpu.memory_space<vmem>>, vector<128x32xbf16>
    %cst_25 = arith.constant dense<0.000000e+00> : vector<8x32xf32>
    %52 = tpu.matmul %50, %51, %cst_25 {dimension_numbers = #tpu.dot_dimension_numbers<[1], [0], [0], [1], [0, 0, 1, 1], [], []>} : vector<8x128xbf16>, vector<128x32xbf16>, vector<8x32xf32> -> vector<8x32xf32>
    %53 = arith.addf %49, %52 : vector<8x32xf32>
    %c0_26 = arith.constant 0 : index
    %c0_27 = arith.constant 0 : index
    %54 = vector.load %arg16[%c0_26, %c0_27] : memref<8x32xf32, #tpu.memory_space<vmem>>, vector<8x32xf32>
    tpu.vector_store %arg16[%c0_26, %c0_27], %53 {strides = array<i32>} : memref<8x32xf32, #tpu.memory_space<vmem>>, vector<8x32xf32>,
    %c0_i32_28 = arith.constant 0 : i32
    %55 = arith.cmpi eq, %arg2, %c0_i32_28 : i32
    %56 = arith.extui %55 : i1 to i32
    %c0_i32_29 = arith.constant 0 : i32
    %57 = arith.cmpi ne, %56, %c0_i32_29 : i32
    scf.if %57 {
      %c0_30 = arith.constant 0 : index
      %c0_31 = arith.constant 0 : index
      %58 = vector.load %arg14[%c0_30, %c0_31] : memref<8x32xf32, #tpu.memory_space<vmem>>, vector<8x32xf32>
      %c0_32 = arith.constant 0 : index
      %c0_33 = arith.constant 0 : index
      %59 = vector.load %arg16[%c0_32, %c0_33] : memref<8x32xf32, #tpu.memory_space<vmem>>, vector<8x32xf32>
      %60 = arith.addf %58, %59 : vector<8x32xf32>
      %c0_34 = arith.constant 0 : index
      %c0_35 = arith.constant 0 : index
      %61 = vector.load %arg12[%c0_34, %c0_35] : memref<1x32xf32, #tpu.memory_space<vmem>>, vector<1x32xf32>
      %62 = vector.broadcast %61 : vector<1x32xf32> to vector<8x32xf32>
      %63 = arith.addf %60, %62 : vector<8x32xf32>
      %c0_36 = arith.constant 0 : index
      %c0_37 = arith.constant 0 : index
      %c0_38 = arith.constant 0 : index
      %64 = vector.load %arg13[%c0_36, %c0_37, %c0_38] : memref<1x8x32xf32, #tpu.memory_space<vmem>>, vector<1x8x32xf32>
      %65 = vector.shape_cast %64 : vector<1x8x32xf32> to vector<8x32xf32>
      %66 = vector.shape_cast %63 : vector<8x32xf32> to vector<1x8x32xf32>
      tpu.vector_store %arg13[%c0_36, %c0_37, %c0_38], %66 {strides = array<i32>} : memref<1x8x32xf32, #tpu.memory_space<vmem>>, vector<1x8x32xf32>,
    } else {
    }
    return
  }
  func.func @transform_0(%arg0: i32, %arg1: i32, %arg2: i32) -> (i32, i32, i32) {
    %c0_i32 = arith.constant 0 : i32
    %c0_i32_0 = arith.constant 0 : i32
    return %arg0, %arg1, %c0_i32 : i32, i32, i32
  }
  func.func @transform_1(%arg0: i32, %arg1: i32, %arg2: i32) -> (i32, i32, i32) {
    %c0_i32 = arith.constant 0 : i32
    %c0_i32_0 = arith.constant 0 : i32
    return %arg0, %arg1, %c0_i32 : i32, i32, i32
  }
  func.func @transform_2(%arg0: i32, %arg1: i32, %arg2: i32) -> (i32, i32) {
    %c0_i32 = arith.constant 0 : i32
    %c0_i32_0 = arith.constant 0 : i32
    %c0_i32_1 = arith.constant 0 : i32
    return %c0_i32, %c0_i32_0 : i32, i32
  }
  func.func @transform_3(%arg0: i32, %arg1: i32, %arg2: i32) -> (i32, i32) {
    %c0_i32 = arith.constant 0 : i32
    %c0_i32_0 = arith.constant 0 : i32
    %c0_i32_1 = arith.constant 0 : i32
    return %c0_i32, %c0_i32_0 : i32, i32
  }
  func.func @transform_4(%arg0: i32, %arg1: i32, %arg2: i32) -> (i32, i32) {
    %c0_i32 = arith.constant 0 : i32
    %c0_i32_0 = arith.constant 0 : i32
    %c0_i32_1 = arith.constant 0 : i32
    return %c0_i32, %c0_i32_0 : i32, i32
  }
  func.func @transform_5(%arg0: i32, %arg1: i32, %arg2: i32) -> (i32, i32) {
    %c0_i32 = arith.constant 0 : i32
    %c0_i32_0 = arith.constant 0 : i32
    %c0_i32_1 = arith.constant 0 : i32
    return %c0_i32, %c0_i32_0 : i32, i32
  }
  func.func @transform_6(%arg0: i32, %arg1: i32, %arg2: i32) -> (i32, i32) {
    %c0_i32 = arith.constant 0 : i32
    %c0_i32_0 = arith.constant 0 : i32
    return %c0_i32, %arg2 : i32, i32
  }
  func.func @transform_7(%arg0: i32, %arg1: i32, %arg2: i32) -> (i32, i32) {
    %c0_i32 = arith.constant 0 : i32
    %c0_i32_0 = arith.constant 0 : i32
    return %c0_i32, %arg2 : i32, i32
  }
  func.func @transform_8(%arg0: i32, %arg1: i32, %arg2: i32) -> (i32, i32) {
    %c0_i32 = arith.constant 0 : i32
    %c0_i32_0 = arith.constant 0 : i32
    return %arg2, %c0_i32 : i32, i32
  }
  func.func @transform_9(%arg0: i32, %arg1: i32, %arg2: i32) -> (i32, i32) {
    %c0_i32 = arith.constant 0 : i32
    %c0_i32_0 = arith.constant 0 : i32
    %c0_i32_1 = arith.constant 0 : i32
    return %c0_i32, %c0_i32_0 : i32, i32
  }
  func.func @transform_10(%arg0: i32, %arg1: i32, %arg2: i32) -> (i32, i32, i32) {
    %c0_i32 = arith.constant 0 : i32
    %c0_i32_0 = arith.constant 0 : i32
    return %arg0, %arg1, %c0_i32 : i32, i32, i32
  }
}

</mosaic_0001>

<llo_original>
// kernel: _vit_block_impl.3
$region0: #{_vit_block_impl.3}
  #allocation0 [shape = 'u32[]', space=smem, size = 0x4, offset = 0x4, fixed_abs, tag = 'smem constant byte address 0x4 - core index']
  #allocation1 [shape = 'u32[144,128]{1,0:T(1,128)}', space=vmem, size = 0x12000, scoped, tag = 'internal scratch']
  #allocation2 [shape = 'bf16[8,32]{1,0:T(8,128)(2,1)}', space=vmem, size = 0x800, scoped, tag = 'scratch operand']
  %s0 = inlined_call_operand.vmem [shape: f32[2,8,32], index: 0, kind: input, shape index: {}]
  %s1 = inlined_call_operand.vmem [shape: f32[1,32], index: 1, kind: input, shape index: {}]
  %s2 = inlined_call_operand.vmem [shape: f32[1,32], index: 2, kind: input, shape index: {}]
  %s3 = inlined_call_operand.vmem [shape: bf16[32,96], index: 3, kind: input, shape index: {}]
  %s4 = inlined_call_operand.vmem [shape: f32[1,96], index: 4, kind: input, shape index: {}]
  %s5 = inlined_call_operand.vmem [shape: bf16[2,8,96], index: 5, kind: output, shape index: {}]
  %s6 = sld [smem:[#allocation0]]
  $region57: #{_vit_block_impl.3} parent=0
    _
  %s8 = ssub.s32 1, %s6
  %s9 = scalar_select 0, %s8, %s6
  loop: start=0, step=1, limit=4
  $region2: #{_vit_block_impl.3} parent=0 // loop_pre_header
    _
  $region3: #{_vit_block_impl.3} parent=0 // loop_header
    %s11 = sphi 0, %s15
    %p12 = scmp.ge.s32.totalorder %s11, 4
    %s18 = sphi 0, %s37
    %s19 = sphi 0, %s33
    %s20 = sphi 0, %s29
    %s21 = sphi 0, %s18
    %s22 = sphi 0, %s19
    %s23 = sphi 0, %s20
    %s24 = sphi 0, %s21
    %s25 = sphi 0, %s22
    %s26 = sphi 0, %s23
    %s42 = sphi 0, %s44
    %s45 = sphi 0, %s42
    %s46 = sphi 0, %s45
    %s62 = sphi 0, %s46
    %s66 = sphi 0, %s66
    %s68 = sphi 0, %s66
    %s69 = sphi 0, %s68
    %s83 = sphi 0, %s69
    %s87 = sphi 0, %s87
    %s89 = sphi 0, %s87
    %s90 = sphi 0, %s89
    %s104 = sphi 0, %s90
    %s110 = sphi 0, %s112
    %s113 = sphi 0, %s110
    %s114 = sphi 0, %s113
    %s130 = sphi 0, %s114
    %s136 = sphi 0, %s138
    %s139 = sphi 0, %s136
    %s140 = sphi 0, %s139
    %s156 = sphi 0, %s140
    %s166 = sphi 0, %s168
    %s169 = sphi 0, %s166
    %s170 = sphi 0, %s169
    %s186 = sphi 0, %s170
  $region4: #{_vit_block_impl.3} parent=0 // loop_header_branch
    %14 = sbr.rel (%p12) target = $region8
  $region5: #{_vit_block_impl.3} parent=0 // loop_body
    %s16 = ssub.s32 %s11, 1
    %s17 = ssub.s32 %s11, 2
    %s27 = sadd.s32 1, %s20
    %p28 = scmp.ge.s32.totalorder %s27, 1
    %s29 = scalar_select %p28, 0, %s27
    %s30 = sadd.s32 1, %s19
    %s31 = scalar_select %p28, %s30, %s19
    %p32 = scmp.ge.s32.totalorder %s31, 1
    %s33 = scalar_select %p32, 0, %s31
    %s34 = sadd.s32 1, %s18
    %s35 = scalar_select %p32, %s34, %s18
    %p36 = scmp.ge.s32.totalorder %s35, 2
    %s37 = scalar_select %p36, 0, %s35
    %s38 = ssub.s32 %s18, %s37
    %s39 = ssub.s32 %s19, %s33
    %s40 = sor.u32 %s38, %s39
    %p41 = scmp.eq.s32.totalorder %s40, 0
    %s43 = sadd.s32 %s42, 1
    %s44 = scalar_select %p41, %s42, %s43
    %p47 = pneg %p41
    %p48 = scmp.eq.s32.totalorder %s11, 1
    %p49 = por %p47, %p48
    %p50 = scmp.ne.s32.totalorder %s42, %s45
    %p51 = scmp.eq.s32.totalorder %s11, 0
    %p52 = por %p50, %p51
    %p53 = scmp.ne.s32.totalorder %s42, %s45
    %p54 = scmp.eq.s32.totalorder %s16, 1
    %p55 = por %p53, %p54
    %p56 = scmp.ne.s32.totalorder %s45, %s46
    %p57 = scmp.eq.s32.totalorder %s16, 0
    %p58 = por %p56, %p57
    %p59 = scmp.ne.s32.totalorder %s45, %s46
    %p60 = scmp.eq.s32.totalorder %s17, 1
    %p61 = por %p59, %p60
    %p63 = scmp.ne.s32.totalorder %s46, %s62
    %p64 = scmp.eq.s32.totalorder %s17, 0
    %p65 = por %p63, %p64
    %s67 = sadd.s32 %s66, 1
    %p70 = scmp.eq.s32.totalorder %s11, 1
    %p71 = scmp.ne.s32.totalorder %s66, %s68
    %p72 = scmp.eq.s32.totalorder %s11, 0
    %p73 = por %p71, %p72
    %p74 = scmp.ne.s32.totalorder %s66, %s68
    %p75 = scmp.eq.s32.totalorder %s16, 1
    %p76 = por %p74, %p75
    %p77 = scmp.ne.s32.totalorder %s68, %s69
    %p78 = scmp.eq.s32.totalorder %s16, 0
    %p79 = por %p77, %p78
    %p80 = scmp.ne.s32.totalorder %s68, %s69
    %p81 = scmp.eq.s32.totalorder %s17, 1
    %p82 = por %p80, %p81
    %p84 = scmp.ne.s32.totalorder %s69, %s83
    %p85 = scmp.eq.s32.totalorder %s17, 0
    %p86 = por %p84, %p85
    %s88 = sadd.s32 %s87, 1
    %p91 = scmp.eq.s32.totalorder %s11, 1
    %p92 = scmp.ne.s32.totalorder %s87, %s89
    %p93 = scmp.eq.s32.totalorder %s11, 0
    %p94 = por %p92, %p93
    %p95 = scmp.ne.s32.totalorder %s87, %s89
    %p96 = scmp.eq.s32.totalorder %s16, 1
    %p97 = por %p95, %p96
    %p98 = scmp.ne.s32.totalorder %s89, %s90
    %p99 = scmp.eq.s32.totalorder %s16, 0
    %p100 = por %p98, %p99
    %p101 = scmp.ne.s32.totalorder %s89, %s90
    %p102 = scmp.eq.s32.totalorder %s17, 1
    %p103 = por %p101, %p102
    %p105 = scmp.ne.s32.totalorder %s90, %s104
    %p106 = scmp.eq.s32.totalorder %s17, 0
    %p107 = por %p105, %p106
    %s108 = ssub.s32 %s20, %s29
    %p109 = scmp.eq.s32.totalorder %s108, 0
    %s111 = sadd.s32 %s110, 1
    %s112 = scalar_select %p109, %s110, %s111
    %p115 = pneg %p109
    %p116 = scmp.eq.s32.totalorder %s11, 1
    %p117 = por %p115, %p116
    %p118 = scmp.ne.s32.totalorder %s110, %s113
    %p119 = scmp.eq.s32.totalorder %s11, 0
    %p120 = por %p118, %p119
    %p121 = scmp.ne.s32.totalorder %s110, %s113
    %p122 = scmp.eq.s32.totalorder %s16, 1
    %p123 = por %p121, %p122
    %p124 = scmp.ne.s32.totalorder %s113, %s114
    %p125 = scmp.eq.s32.totalorder %s16, 0
    %p126 = por %p124, %p125
    %p127 = scmp.ne.s32.totalorder %s113, %s114
    %p128 = scmp.eq.s32.totalorder %s17, 1
    %p129 = por %p127, %p128
    %p131 = scmp.ne.s32.totalorder %s114, %s130
    %p132 = scmp.eq.s32.totalorder %s17, 0
    %p133 = por %p131, %p132
    %s134 = ssub.s32 %s20, %s29
    %p135 = scmp.eq.s32.totalorder %s134, 0
    %s137 = sadd.s32 %s136, 1
    %s138 = scalar_select %p135, %s136, %s137
    %p141 = pneg %p135
    %p142 = scmp.eq.s32.totalorder %s11, 1
    %p143 = por %p141, %p142
    %p144 = scmp.ne.s32.totalorder %s136, %s139
    %p145 = scmp.eq.s32.totalorder %s11, 0
    %p146 = por %p144, %p145
    %p147 = scmp.ne.s32.totalorder %s136, %s139
    %p148 = scmp.eq.s32.totalorder %s16, 1
    %p149 = por %p147, %p148
    %p150 = scmp.ne.s32.totalorder %s139, %s140
    %p151 = scmp.eq.s32.totalorder %s16, 0
    %p152 = por %p150, %p151
    %p153 = scmp.ne.s32.totalorder %s139, %s140
    %p154 = scmp.eq.s32.totalorder %s17, 1
    %p155 = por %p153, %p154
    %p157 = scmp.ne.s32.totalorder %s140, %s156
    %p158 = scmp.eq.s32.totalorder %s17, 0
    %p159 = por %p157, %p158
    %s160 = ssub.s32 %s18, %s37
    %s161 = ssub.s32 %s19, %s33
    %s162 = sor.u32 %s160, %s161
    %s163 = ssub.s32 %s20, %s29
    %s164 = sor.u32 %s162, %s163
    %p165 = scmp.eq.s32.totalorder %s164, 0
    %s167 = sadd.s32 %s166, 1
    %s168 = scalar_select %p165, %s166, %s167
    %p171 = pneg %p165
    %p172 = scmp.eq.s32.totalorder %s11, 1
    %p173 = por %p171, %p172
    %p174 = scmp.ne.s32.totalorder %s166, %s169
    %p175 = scmp.eq.s32.totalorder %s11, 0
    %p176 = por %p174, %p175
    %p177 = scmp.ne.s32.totalorder %s166, %s169
    %p178 = scmp.eq.s32.totalorder %s16, 1
    %p179 = por %p177, %p178
    %p180 = scmp.ne.s32.totalorder %s169, %s170
    %p181 = scmp.eq.s32.totalorder %s16, 0
    %p182 = por %p180, %p181
    %p183 = scmp.ne.s32.totalorder %s169, %s170
    %p184 = scmp.eq.s32.totalorder %s17, 1
    %p185 = por %p183, %p184
    %p187 = scmp.ne.s32.totalorder %s170, %s186
    %p188 = scmp.eq.s32.totalorder %s17, 0
    %p189 = por %p187, %p188
    %p190 = scmp.le.s32.totalorder 1, %s11
    %p191 = scmp.lt.s32.totalorder %s11, 3
    %p192 = pnand %p190, %p191
    %p193 = pneg %p192
    // Predicated region
    $region9: #{_vit_block_impl.3} parent=5 // pred_check
      _
    $region10: #{_vit_block_impl.3} parent=5 // pred_check_branch
      %195 = sbr.rel (%p192) target = $region12
    $region11: #{_vit_block_impl.3} parent=5 // pred_region
      %s196 = ssub.s32 %s11, 1
      // Predicated region
      $region13: #{_vit_block_impl.3} parent=11 // pred_check
        %p197 = pneg %p79
      $region14: #{_vit_block_impl.3} parent=11 // pred_check_branch
        %199 = sbr.rel (%p197) target = $region16
      $region15: #{_vit_block_impl.3} parent=11 // pred_region
        _
      $region16: #{_vit_block_impl.3} parent=11 // pred_fallthru
        _
      // Predicated region
      $region17: #{_vit_block_impl.3} parent=11 // pred_check
        %p200 = pneg %p100
      $region18: #{_vit_block_impl.3} parent=11 // pred_check_branch
        %202 = sbr.rel (%p200) target = $region20
      $region19: #{_vit_block_impl.3} parent=11 // pred_region
        _
      $region20: #{_vit_block_impl.3} parent=11 // pred_fallthru
        _
      // Predicated region
      $region21: #{_vit_block_impl.3} parent=11 // pred_check
        %p203 = pneg %p126
      $region22: #{_vit_block_impl.3} parent=11 // pred_check_branch
        %205 = sbr.rel (%p203) target = $region24
      $region23: #{_vit_block_impl.3} parent=11 // pred_region
        %p206 = scmp.lt.s32.totalorder %s23, 0
        %s207 = scalar_select %p206, %s23, 0
        %s208 = smul.addr %s207, 4
        %s209 = scalar_lea.vmem %s3, %s208
      $region24: #{_vit_block_impl.3} parent=11 // pred_fallthru
        _
      // Predicated region
      $region25: #{_vit_block_impl.3} parent=11 // pred_check
        %p210 = pneg %p152
      $region26: #{_vit_block_impl.3} parent=11 // pred_check_branch
        %212 = sbr.rel (%p210) target = $region28
      $region27: #{_vit_block_impl.3} parent=11 // pred_region
        %p213 = scmp.lt.s32.totalorder %s23, 0
        %s214 = scalar_select %p213, %s23, 0
        %s215 = scalar_lea.vmem %s4, %s214
      $region28: #{_vit_block_impl.3} parent=11 // pred_fallthru
        _
    $region12: #{_vit_block_impl.3} parent=5 // pred_fallthru
      _
    %p216 = scmp.lt.s32.totalorder %s11, 2
    // Predicated region
    $region29: #{_vit_block_impl.3} parent=5 // pred_check
      %p217 = pneg %p216
    $region30: #{_vit_block_impl.3} parent=5 // pred_check_branch
      %219 = sbr.rel (%p217) target = $region32
    $region31: #{_vit_block_impl.3} parent=5 // pred_region
      // Predicated region
      $region33: #{_vit_block_impl.3} parent=31 // pred_check
        %p220 = pneg %p52
      $region34: #{_vit_block_impl.3} parent=31 // pred_check_branch
        %222 = sbr.rel (%p220) target = $region36
      $region35: #{_vit_block_impl.3} parent=31 // pred_region
        %p223 = scmp.lt.s32.totalorder %s18, 1
        %s224 = scalar_select %p223, %s18, 1
        %p225 = scmp.lt.s32.totalorder %s19, 0
        %s226 = scalar_select %p225, %s19, 0
        %s227 = sadd.s32 %s226, %s224
        %s228 = smul.addr %s227, 8
        %s229 = scalar_lea.vmem %s0, %s228
      $region36: #{_vit_block_impl.3} parent=31 // pred_fallthru
        _
    $region32: #{_vit_block_impl.3} parent=5 // pred_fallthru
      _
    %p230 = scmp.le.s32.totalorder 1, %s11
    %p231 = scmp.lt.s32.totalorder %s11, 3
    %p232 = pnand %p230, %p231
    %p233 = pneg %p232
    // Predicated region
    $region37: #{_vit_block_impl.3} parent=5 // pred_check
      _
    $region38: #{_vit_block_impl.3} parent=5 // pred_check_branch
      %235 = sbr.rel (%p232) target = $region40
    $region39: #{_vit_block_impl.3} parent=5 // pred_region
      %s236 = ssub.s32 %s11, 1
      %p237 = scmp.lt.s32.totalorder %s21, 1
      %s238 = scalar_select %p237, %s21, 1
      %p239 = scmp.lt.s32.totalorder %s22, 0
      %s240 = scalar_select %p239, %s22, 0
      %s241 = sadd.s32 %s240, %s238
      %s242 = smul.addr %s241, 8
      %s243 = scalar_lea.vmem %s0, %s242
      %p244 = pneg %p58
      %p245 = pneg %p55
      %p246 = pneg %p79
      %p247 = pneg %p76
      %p248 = pneg %p100
      %p249 = pneg %p97
      %p250 = scmp.lt.s32.totalorder %s23, 0
      %s251 = scalar_select %p250, %s23, 0
      %s252 = smul.addr %s251, 4
      %s253 = scalar_lea.vmem %s3, %s252
      %p254 = pneg %p126
      %p255 = pneg %p123
      %p256 = scmp.lt.s32.totalorder %s23, 0
      %s257 = scalar_select %p256, %s23, 0
      %s258 = scalar_lea.vmem %s4, %s257
      %p259 = pneg %p152
      %p260 = pneg %p149
      %p261 = pneg %p182
      %p262 = pneg %p179
      %p263 = scmp.lt.s32.totalorder %s21, 1
      %s264 = scalar_select %p263, %s21, 1
      %p265 = scmp.lt.s32.totalorder %s22, 0
      %s266 = scalar_select %p265, %s22, 0
      %p267 = scmp.lt.s32.totalorder %s23, 0
      %s268 = scalar_select %p267, %s23, 0
      %s269 = sadd.s32 %s268, %s266
      %s270 = sadd.s32 %s269, %s264
      %s271 = smul.addr %s270, 4
      %s272 = scalar_lea.vmem %s5, %s271
      %p273 = scmp.lt.s32.totalorder %s21, 1
      %s274 = scalar_select %p273, %s21, 1
      %p275 = scmp.lt.s32.totalorder %s22, 0
      %s276 = scalar_select %p275, %s22, 0
      %s277 = sadd.s32 %s276, %s274
      %s278 = smul.addr %s277, 8
      %s279 = scalar_lea.vmem %s0, %s278
      %p280 = scmp.lt.s32.totalorder %s23, 0
      %s281 = scalar_select %p280, %s23, 0
      %s282 = smul.addr %s281, 4
      %s283 = scalar_lea.vmem %s3, %s282
      %p284 = scmp.lt.s32.totalorder %s23, 0
      %s285 = scalar_select %p284, %s23, 0
      %s286 = scalar_lea.vmem %s4, %s285
      %p287 = scmp.lt.s32.totalorder %s21, 1
      %s288 = scalar_select %p287, %s21, 1
      %p289 = scmp.lt.s32.totalorder %s22, 0
      %s290 = scalar_select %p289, %s22, 0
      %p291 = scmp.lt.s32.totalorder %s23, 0
      %s292 = scalar_select %p291, %s23, 0
      %s293 = sadd.s32 %s292, %s290
      %s294 = sadd.s32 %s293, %s288
      %s295 = smul.addr %s294, 4
      %s296 = scalar_lea.vmem %s5, %s295
      %p298 = scmp.eq.s32.totalorder %s23, 0
      // Predicated region
      $region41: #{_vit_block_impl.3} parent=39 // pred_check
        %p299 = pneg %p298
      $region42: #{_vit_block_impl.3} parent=39 // pred_check_branch
        %301 = sbr.rel (%p299) target = $region44
      $region43: #{_vit_block_impl.3} parent=39 // pred_region
        %v302 = vld [vmem:[%s279] sm:$0xff]
        %v303 = vld [vmem:[%s1] sm:$0x1]
        %v304 = vld [vmem:[%s2] sm:$0x1]
        %vm305 = vcmask 261120
        %v306 = vsel %vm305, %v302, 0.0
        %307 = vadd.xlane.f32.xlu0 %v306
        %v308 = vpop.xlane.xlu0 %307
        %v309 = vrcp.pop 32.0
        %v310 = vmul.f32 %v308, %v309
        %v311 = vsub.f32 %v302, %v310
        %v312 = vmul.f32 %v311, %v311
        %v313 = vsel %vm305, %v312, 0.0
        %314 = vadd.xlane.f32.xlu0 %v313
        %v315 = vpop.xlane.xlu0 %314
        %v316 = vmul.f32 %v315, %v309
        %v317 = vadd.f32 %v316, 1e-06
        %v318 = vrsqrt.pop %v317
        %v319 = vmul.f32 %v311, %v318
        %v321 = vlaneseq
        %v322 = vshrl.u32 %v321, 7
        %v323 = vsub.s32 0, %v322
        %v324 = vrot.slane %v303, %v323
        %v326 = vmul.f32 %v319, %v324
        %v328 = vlaneseq
        %v329 = vshrl.u32 %v328, 7
        %v330 = vsub.s32 0, %v329
        %v331 = vrot.slane %v304, %v330
        %v333 = vadd.f32 %v326, %v331
        %v334 = vpack.c.bf16 %v333, %v333
        %vm335 = vcmask 257024
        %336 = vst.msk [vmem:[#allocation2] sm:$0xf] %vm335, %v334
      $region44: #{_vit_block_impl.3} parent=39 // pred_fallthru
        _
      %v337 = vld [vmem:[#allocation2] sm:$0xf]
      %v338 = vld [vmem:[%s283] sm:$0xf]
      %v339 = vld [vmem:[%s283 + $0x4] sm:$0xf]
      %v340 = vld [vmem:[%s283 + $0x8] sm:$0xf]
      %v341 = vld [vmem:[%s283 + $0xc] sm:$0xf]
      %v342 = vld [vmem:[%s286] sm:$0x1]
      %v344 = vlaneseq
      %v345 = vshrl.u32 %v344, 7
      %v346 = vsub.s32 0, %v345
      %v347 = vrot.slane %v342, %v346
      %v353 = vunpack.c.l.b16 %v338
      %v354 = vunpack.c.l.b16 %v339
      %v355 = vunpack.c.l.b16 %v340
      %v356 = vunpack.c.l.b16 %v341
      %v357 = vpack.c.b16 %v354, %v353
      %v358 = vpack.c.b16 %v356, %v355
      %vm361 = vcmask 261120
      %v363 = vsel %vm361, %v337, 0
      %365 = vmatprep.subr.bf16.mxu0 0
      %366 = vmatpush1.bf16.msra.mxu0 %v357
      %367 = vmatprep.subr.bf16.mxu0 0
      %368 = vmatpush1.bf16.msra.mxu0 %v358
      %369 = vmatprep.subr.bf16.mxu0 0
      %370 = vmatpush1.bf16.msra.mxu0 0
      %371 = vmatprep.subr.bf16.mxu0 0
      %372 = vmatpush1.bf16.msra.mxu0 0
      %373 = vmatprep.subr.bf16.mxu0 0
      %374 = vmatpush1.bf16.msra.mxu0 0
      %375 = vmatprep.subr.bf16.mxu0 0
      %376 = vmatpush1.bf16.msra.mxu0 0
      %377 = vmatprep.subr.bf16.mxu0 0
      %378 = vmatpush1.bf16.msra.mxu0 0
      %379 = vmatprep.subr.bf16.mxu0 0
      %380 = vmatpush1.bf16.msra.mxu0 0
      %381 = vmatprep.subr.bf16.mxu0 0
      %382 = vmatpush1.bf16.msra.mxu0 0
      %383 = vmatprep.subr.bf16.mxu0 0
      %384 = vmatpush1.bf16.msra.mxu0 0
      %385 = vmatprep.subr.bf16.mxu0 0
      %386 = vmatpush1.bf16.msra.mxu0 0
      %387 = vmatprep.subr.bf16.mxu0 0
      %388 = vmatpush1.bf16.msra.mxu0 0
      %389 = vmatprep.subr.bf16.mxu0 0
      %390 = vmatpush1.bf16.msra.mxu0 0
      %391 = vmatprep.subr.bf16.mxu0 0
      %392 = vmatpush1.bf16.msra.mxu0 0
      %393 = vmatprep.subr.bf16.mxu0 0
      %394 = vmatpush1.bf16.msra.mxu0 0
      %395 = vmatprep.subr.bf16.mxu0 0
      %396 = vmatpush1.bf16.msra.mxu0 0
      %397 = vmatprep.mubr.bf16.mxu0 0
      %398 = vmatmul.mubr.bf16.gmra.mrb[0].mxu0 %v363
      %v399 = vpop.f32.mrb[0].mxu0
      %v400 = vadd.f32 %v347, %v399
      %v401 = vpop.f32.mrb[0].mxu0
      %v402 = vpop.f32.mrb[0].mxu0
      %v403 = vpop.f32.mrb[0].mxu0
      %404 = vdwg.mxu0
      %v405 = vpack.c.bf16 %v400, %v400
      %vm406 = vcmask 781312
      %407 = vst.msk [vmem:[%s296] sm:$0xf] %vm406, %v405
      %p408 = scmp.lt.s32.totalorder %s21, 1
      %s409 = scalar_select %p408, %s21, 1
      %p410 = scmp.lt.s32.totalorder %s22, 0
      %s411 = scalar_select %p410, %s22, 0
      %p412 = scmp.lt.s32.totalorder %s23, 0
      %s413 = scalar_select %p412, %s23, 0
      %s414 = sadd.s32 %s413, %s411
      %s415 = sadd.s32 %s414, %s409
      %s416 = smul.addr %s415, 4
      %s417 = scalar_lea.vmem %s5, %s416
      // Predicated region
      $region45: #{_vit_block_impl.3} parent=39 // pred_check
        %p418 = pneg %p179
      $region46: #{_vit_block_impl.3} parent=39 // pred_check_branch
        %420 = sbr.rel (%p418) target = $region48
      $region47: #{_vit_block_impl.3} parent=39 // pred_region
        _
      $region48: #{_vit_block_impl.3} parent=39 // pred_fallthru
        _
    $region40: #{_vit_block_impl.3} parent=5 // pred_fallthru
      _
    %p421 = scmp.le.s32.totalorder 2, %s11
    // Predicated region
    $region49: #{_vit_block_impl.3} parent=5 // pred_check
      %p422 = pneg %p421
    $region50: #{_vit_block_impl.3} parent=5 // pred_check_branch
      %424 = sbr.rel (%p422) target = $region52
    $region51: #{_vit_block_impl.3} parent=5 // pred_region
      %s425 = ssub.s32 %s11, 2
      // Predicated region
      $region53: #{_vit_block_impl.3} parent=51 // pred_check
        %p426 = pneg %p185
      $region54: #{_vit_block_impl.3} parent=51 // pred_check_branch
        %428 = sbr.rel (%p426) target = $region56
      $region55: #{_vit_block_impl.3} parent=51 // pred_region
        %p429 = scmp.lt.s32.totalorder %s24, 1
        %s430 = scalar_select %p429, %s24, 1
        %p431 = scmp.lt.s32.totalorder %s25, 0
        %s432 = scalar_select %p431, %s25, 0
        %p433 = scmp.lt.s32.totalorder %s26, 0
        %s434 = scalar_select %p433, %s26, 0
        %s435 = sadd.s32 %s434, %s432
        %s436 = sadd.s32 %s435, %s430
        %s437 = smul.addr %s436, 4
        %s438 = scalar_lea.vmem %s5, %s437
      $region56: #{_vit_block_impl.3} parent=51 // pred_fallthru
        _
    $region52: #{_vit_block_impl.3} parent=5 // pred_fallthru
      _
  $region6: #{_vit_block_impl.3} parent=0 // loop_footer
    %s15 = sadd.s32 1, %s11
  $region7: #{_vit_block_impl.3} parent=0 // loop_footer_branch
    %10 = sbr.rel target = $region3
  $region8: #{_vit_block_impl.3} parent=0 // loop_exit
    _

// kernel: _vit_block_impl.4
$region0: #{_vit_block_impl.4}
  #allocation0 [shape = 'u32[]', space=smem, size = 0x4, offset = 0x4, fixed_abs, tag = 'smem constant byte address 0x4 - core index']
  #allocation1 [shape = 'u32[144,128]{1,0:T(1,128)}', space=vmem, size = 0x12000, scoped, tag = 'internal scratch']
  #allocation2 [shape = 'f32[8,1]{1,0:T(8,128)}', space=vmem, size = 0x1000, scoped, tag = 'scratch operand']
  #allocation3 [shape = 'f32[8,1]{1,0:T(8,128)}', space=vmem, size = 0x1000, scoped, tag = 'scratch operand']
  #allocation4 [shape = 'f32[8,8]{1,0:T(8,128)}', space=vmem, size = 0x1000, scoped, tag = 'scratch operand']
  %s0 = inlined_call_operand.vmem [shape: bf16[2,4,8,8], index: 0, kind: input, shape index: {}]
  %s1 = inlined_call_operand.vmem [shape: bf16[2,4,8,8], index: 1, kind: input, shape index: {}]
  %s2 = inlined_call_operand.vmem [shape: bf16[2,4,8,8], index: 2, kind: input, shape index: {}]
  %s3 = inlined_call_operand.vmem [shape: bf16[2,4,8,8], index: 3, kind: output, shape index: {}]
  %s4 = sld [smem:[#allocation0]]
  $region53: #{_vit_block_impl.4} parent=0
    _
  %s6 = ssub.s32 1, %s4
  %s7 = scalar_select 0, %s6, %s4
  loop: start=0, step=1, limit=10
  $region2: #{_vit_block_impl.4} parent=0 // loop_pre_header
    _
  $region3: #{_vit_block_impl.4} parent=0 // loop_header
    %s9 = sphi 0, %s13
    %p10 = scmp.ge.s32.totalorder %s9, 10
    %s16 = sphi 0, %s42
    %s17 = sphi 0, %s38
    %s18 = sphi 0, %s34
    %s19 = sphi 0, %s30
    %s20 = sphi 0, %s16
    %s21 = sphi 0, %s17
    %s22 = sphi 0, %s18
    %s23 = sphi 0, %s19
    %s24 = sphi 0, %s20
    %s25 = sphi 0, %s21
    %s26 = sphi 0, %s22
    %s27 = sphi 0, %s23
    %s49 = sphi 0, %s51
    %s52 = sphi 0, %s49
    %s53 = sphi 0, %s52
    %s69 = sphi 0, %s53
    %s79 = sphi 0, %s81
    %s82 = sphi 0, %s79
    %s83 = sphi 0, %s82
    %s99 = sphi 0, %s83
    %s109 = sphi 0, %s111
    %s112 = sphi 0, %s109
    %s113 = sphi 0, %s112
    %s129 = sphi 0, %s113
    %s139 = sphi 0, %s141
    %s142 = sphi 0, %s139
    %s143 = sphi 0, %s142
    %s159 = sphi 0, %s143
  $region4: #{_vit_block_impl.4} parent=0 // loop_header_branch
    %12 = sbr.rel (%p10) target = $region8
  $region5: #{_vit_block_impl.4} parent=0 // loop_body
    %s14 = ssub.s32 %s9, 1
    %s15 = ssub.s32 %s9, 2
    %s28 = sadd.s32 1, %s19
    %p29 = scmp.ge.s32.totalorder %s28, 1
    %s30 = scalar_select %p29, 0, %s28
    %s31 = sadd.s32 1, %s18
    %s32 = scalar_select %p29, %s31, %s18
    %p33 = scmp.ge.s32.totalorder %s32, 1
    %s34 = scalar_select %p33, 0, %s32
    %s35 = sadd.s32 1, %s17
    %s36 = scalar_select %p33, %s35, %s17
    %p37 = scmp.ge.s32.totalorder %s36, 4
    %s38 = scalar_select %p37, 0, %s36
    %s39 = sadd.s32 1, %s16
    %s40 = scalar_select %p37, %s39, %s16
    %p41 = scmp.ge.s32.totalorder %s40, 2
    %s42 = scalar_select %p41, 0, %s40
    %s43 = ssub.s32 %s16, %s42
    %s44 = ssub.s32 %s17, %s38
    %s45 = sor.u32 %s43, %s44
    %s46 = ssub.s32 %s18, %s34
    %s47 = sor.u32 %s45, %s46
    %p48 = scmp.eq.s32.totalorder %s47, 0
    %s50 = sadd.s32 %s49, 1
    %s51 = scalar_select %p48, %s49, %s50
    %p54 = pneg %p48
    %p55 = scmp.eq.s32.totalorder %s9, 7
    %p56 = por %p54, %p55
    %p57 = scmp.ne.s32.totalorder %s49, %s52
    %p58 = scmp.eq.s32.totalorder %s9, 0
    %p59 = por %p57, %p58
    %p60 = scmp.ne.s32.totalorder %s49, %s52
    %p61 = scmp.eq.s32.totalorder %s14, 7
    %p62 = por %p60, %p61
    %p63 = scmp.ne.s32.totalorder %s52, %s53
    %p64 = scmp.eq.s32.totalorder %s14, 0
    %p65 = por %p63, %p64
    %p66 = scmp.ne.s32.totalorder %s52, %s53
    %p67 = scmp.eq.s32.totalorder %s15, 7
    %p68 = por %p66, %p67
    %p70 = scmp.ne.s32.totalorder %s53, %s69
    %p71 = scmp.eq.s32.totalorder %s15, 0
    %p72 = por %p70, %p71
    %s73 = ssub.s32 %s16, %s42
    %s74 = ssub.s32 %s17, %s38
    %s75 = sor.u32 %s73, %s74
    %s76 = ssub.s32 %s19, %s30
    %s77 = sor.u32 %s75, %s76
    %p78 = scmp.eq.s32.totalorder %s77, 0
    %s80 = sadd.s32 %s79, 1
    %s81 = scalar_select %p78, %s79, %s80
    %p84 = pneg %p78
    %p85 = scmp.eq.s32.totalorder %s9, 7
    %p86 = por %p84, %p85
    %p87 = scmp.ne.s32.totalorder %s79, %s82
    %p88 = scmp.eq.s32.totalorder %s9, 0
    %p89 = por %p87, %p88
    %p90 = scmp.ne.s32.totalorder %s79, %s82
    %p91 = scmp.eq.s32.totalorder %s14, 7
    %p92 = por %p90, %p91
    %p93 = scmp.ne.s32.totalorder %s82, %s83
    %p94 = scmp.eq.s32.totalorder %s14, 0
    %p95 = por %p93, %p94
    %p96 = scmp.ne.s32.totalorder %s82, %s83
    %p97 = scmp.eq.s32.totalorder %s15, 7
    %p98 = por %p96, %p97
    %p100 = scmp.ne.s32.totalorder %s83, %s99
    %p101 = scmp.eq.s32.totalorder %s15, 0
    %p102 = por %p100, %p101
    %s103 = ssub.s32 %s16, %s42
    %s104 = ssub.s32 %s17, %s38
    %s105 = sor.u32 %s103, %s104
    %s106 = ssub.s32 %s19, %s30
    %s107 = sor.u32 %s105, %s106
    %p108 = scmp.eq.s32.totalorder %s107, 0
    %s110 = sadd.s32 %s109, 1
    %s111 = scalar_select %p108, %s109, %s110
    %p114 = pneg %p108
    %p115 = scmp.eq.s32.totalorder %s9, 7
    %p116 = por %p114, %p115
    %p117 = scmp.ne.s32.totalorder %s109, %s112
    %p118 = scmp.eq.s32.totalorder %s9, 0
    %p119 = por %p117, %p118
    %p120 = scmp.ne.s32.totalorder %s109, %s112
    %p121 = scmp.eq.s32.totalorder %s14, 7
    %p122 = por %p120, %p121
    %p123 = scmp.ne.s32.totalorder %s112, %s113
    %p124 = scmp.eq.s32.totalorder %s14, 0
    %p125 = por %p123, %p124
    %p126 = scmp.ne.s32.totalorder %s112, %s113
    %p127 = scmp.eq.s32.totalorder %s15, 7
    %p128 = por %p126, %p127
    %p130 = scmp.ne.s32.totalorder %s113, %s129
    %p131 = scmp.eq.s32.totalorder %s15, 0
    %p132 = por %p130, %p131
    %s133 = ssub.s32 %s16, %s42
    %s134 = ssub.s32 %s17, %s38
    %s135 = sor.u32 %s133, %s134
    %s136 = ssub.s32 %s18, %s34
    %s137 = sor.u32 %s135, %s136
    %p138 = scmp.eq.s32.totalorder %s137, 0
    %s140 = sadd.s32 %s139, 1
    %s141 = scalar_select %p138, %s139, %s140
    %p144 = pneg %p138
    %p145 = scmp.eq.s32.totalorder %s9, 7
    %p146 = por %p144, %p145
    %p147 = scmp.ne.s32.totalorder %s139, %s142
    %p148 = scmp.eq.s32.totalorder %s9, 0
    %p149 = por %p147, %p148
    %p150 = scmp.ne.s32.totalorder %s139, %s142
    %p151 = scmp.eq.s32.totalorder %s14, 7
    %p152 = por %p150, %p151
    %p153 = scmp.ne.s32.totalorder %s142, %s143
    %p154 = scmp.eq.s32.totalorder %s14, 0
    %p155 = por %p153, %p154
    %p156 = scmp.ne.s32.totalorder %s142, %s143
    %p157 = scmp.eq.s32.totalorder %s15, 7
    %p158 = por %p156, %p157
    %p160 = scmp.ne.s32.totalorder %s143, %s159
    %p161 = scmp.eq.s32.totalorder %s15, 0
    %p162 = por %p160, %p161
    %p163 = scmp.le.s32.totalorder 1, %s9
    %p164 = scmp.lt.s32.totalorder %s9, 9
    %p165 = pnand %p163, %p164
    %p166 = pneg %p165
    // Predicated region
    $region9: #{_vit_block_impl.4} parent=5 // pred_check
      _
    $region10: #{_vit_block_impl.4} parent=5 // pred_check_branch
      %168 = sbr.rel (%p165) target = $region12
    $region11: #{_vit_block_impl.4} parent=5 // pred_region
      %s169 = ssub.s32 %s9, 1
    $region12: #{_vit_block_impl.4} parent=5 // pred_fallthru
      _
    %p170 = scmp.lt.s32.totalorder %s9, 8
    // Predicated region
    $region13: #{_vit_block_impl.4} parent=5 // pred_check
      %p171 = pneg %p170
    $region14: #{_vit_block_impl.4} parent=5 // pred_check_branch
      %173 = sbr.rel (%p171) target = $region16
    $region15: #{_vit_block_impl.4} parent=5 // pred_region
      // Predicated region
      $region17: #{_vit_block_impl.4} parent=15 // pred_check
        %p174 = pneg %p59
      $region18: #{_vit_block_impl.4} parent=15 // pred_check_branch
        %176 = sbr.rel (%p174) target = $region20
      $region19: #{_vit_block_impl.4} parent=15 // pred_region
        %p177 = scmp.lt.s32.totalorder %s16, 1
        %s178 = scalar_select %p177, %s16, 1
        %p179 = scmp.lt.s32.totalorder %s17, 3
        %s180 = scalar_select %p179, %s17, 3
        %p181 = scmp.lt.s32.totalorder %s18, 0
        %s182 = scalar_select %p181, %s18, 0
        %s183 = sadd.s32 %s182, %s180
        %s184 = smul.addr %s178, 4
        %s185 = sadd.s32 %s183, %s184
        %s186 = smul.addr %s185, 4
        %s187 = scalar_lea.vmem %s0, %s186
      $region20: #{_vit_block_impl.4} parent=15 // pred_fallthru
        _
      // Predicated region
      $region21: #{_vit_block_impl.4} parent=15 // pred_check
        %p188 = pneg %p89
      $region22: #{_vit_block_impl.4} parent=15 // pred_check_branch
        %190 = sbr.rel (%p188) target = $region24
      $region23: #{_vit_block_impl.4} parent=15 // pred_region
        %p191 = scmp.lt.s32.totalorder %s16, 1
        %s192 = scalar_select %p191, %s16, 1
        %p193 = scmp.lt.s32.totalorder %s17, 3
        %s194 = scalar_select %p193, %s17, 3
        %p195 = scmp.lt.s32.totalorder %s19, 0
        %s196 = scalar_select %p195, %s19, 0
        %s197 = sadd.s32 %s196, %s194
        %s198 = smul.addr %s192, 4
        %s199 = sadd.s32 %s197, %s198
        %s200 = smul.addr %s199, 4
        %s201 = scalar_lea.vmem %s1, %s200
      $region24: #{_vit_block_impl.4} parent=15 // pred_fallthru
        _
      // Predicated region
      $region25: #{_vit_block_impl.4} parent=15 // pred_check
        %p202 = pneg %p119
      $region26: #{_vit_block_impl.4} parent=15 // pred_check_branch
        %204 = sbr.rel (%p202) target = $region28
      $region27: #{_vit_block_impl.4} parent=15 // pred_region
        %p205 = scmp.lt.s32.totalorder %s16, 1
        %s206 = scalar_select %p205, %s16, 1
        %p207 = scmp.lt.s32.totalorder %s17, 3
        %s208 = scalar_select %p207, %s17, 3
        %p209 = scmp.lt.s32.totalorder %s19, 0
        %s210 = scalar_select %p209, %s19, 0
        %s211 = sadd.s32 %s210, %s208
        %s212 = smul.addr %s206, 4
        %s213 = sadd.s32 %s211, %s212
        %s214 = smul.addr %s213, 4
        %s215 = scalar_lea.vmem %s2, %s214
      $region28: #{_vit_block_impl.4} parent=15 // pred_fallthru
        _
    $region16: #{_vit_block_impl.4} parent=5 // pred_fallthru
      _
    %p216 = scmp.le.s32.totalorder 1, %s9
    %p217 = scmp.lt.s32.totalorder %s9, 9
    %p218 = pnand %p216, %p217
    %p219 = pneg %p218
    // Predicated region
    $region29: #{_vit_block_impl.4} parent=5 // pred_check
      _
    $region30: #{_vit_block_impl.4} parent=5 // pred_check_branch
      %221 = sbr.rel (%p218) target = $region32
    $region31: #{_vit_block_impl.4} parent=5 // pred_region
      %s222 = ssub.s32 %s9, 1
      %p223 = scmp.lt.s32.totalorder %s20, 1
      %s224 = scalar_select %p223, %s20, 1
      %p225 = scmp.lt.s32.totalorder %s21, 3
      %s226 = scalar_select %p225, %s21, 3
      %p227 = scmp.lt.s32.totalorder %s22, 0
      %s228 = scalar_select %p227, %s22, 0
      %s229 = sadd.s32 %s228, %s226
      %s230 = smul.addr %s224, 4
      %s231 = sadd.s32 %s229, %s230
      %s232 = smul.addr %s231, 4
      %s233 = scalar_lea.vmem %s0, %s232
      %p234 = pneg %p65
      %p235 = pneg %p62
      %p236 = scmp.lt.s32.totalorder %s20, 1
      %s237 = scalar_select %p236, %s20, 1
      %p238 = scmp.lt.s32.totalorder %s21, 3
      %s239 = scalar_select %p238, %s21, 3
      %p240 = scmp.lt.s32.totalorder %s23, 0
      %s241 = scalar_select %p240, %s23, 0
      %s242 = sadd.s32 %s241, %s239
      %s243 = smul.addr %s237, 4
      %s244 = sadd.s32 %s242, %s243
      %s245 = smul.addr %s244, 4
      %s246 = scalar_lea.vmem %s1, %s245
      %p247 = pneg %p95
      %p248 = pneg %p92
      %p249 = scmp.lt.s32.totalorder %s20, 1
      %s250 = scalar_select %p249, %s20, 1
      %p251 = scmp.lt.s32.totalorder %s21, 3
      %s252 = scalar_select %p251, %s21, 3
      %p253 = scmp.lt.s32.totalorder %s23, 0
      %s254 = scalar_select %p253, %s23, 0
      %s255 = sadd.s32 %s254, %s252
      %s256 = smul.addr %s250, 4
      %s257 = sadd.s32 %s255, %s256
      %s258 = smul.addr %s257, 4
      %s259 = scalar_lea.vmem %s2, %s258
      %p260 = pneg %p125
      %p261 = pneg %p122
      %p262 = pneg %p155
      %p263 = pneg %p152
      %p264 = scmp.lt.s32.totalorder %s20, 1
      %s265 = scalar_select %p264, %s20, 1
      %p266 = scmp.lt.s32.totalorder %s21, 3
      %s267 = scalar_select %p266, %s21, 3
      %p268 = scmp.lt.s32.totalorder %s22, 0
      %s269 = scalar_select %p268, %s22, 0
      %s270 = sadd.s32 %s269, %s267
      %s271 = smul.addr %s265, 4
      %s272 = sadd.s32 %s270, %s271
      %s273 = smul.addr %s272, 4
      %s274 = scalar_lea.vmem %s3, %s273
      %p275 = scmp.lt.s32.totalorder %s20, 1
      %s276 = scalar_select %p275, %s20, 1
      %p277 = scmp.lt.s32.totalorder %s21, 3
      %s278 = scalar_select %p277, %s21, 3
      %p279 = scmp.lt.s32.totalorder %s22, 0
      %s280 = scalar_select %p279, %s22, 0
      %s281 = sadd.s32 %s280, %s278
      %s282 = smul.addr %s276, 4
      %s283 = sadd.s32 %s281, %s282
      %s284 = smul.addr %s283, 4
      %s285 = scalar_lea.vmem %s0, %s284
      %p286 = scmp.lt.s32.totalorder %s20, 1
      %s287 = scalar_select %p286, %s20, 1
      %p288 = scmp.lt.s32.totalorder %s21, 3
      %s289 = scalar_select %p288, %s21, 3
      %p290 = scmp.lt.s32.totalorder %s23, 0
      %s291 = scalar_select %p290, %s23, 0
      %s292 = sadd.s32 %s291, %s289
      %s293 = smul.addr %s287, 4
      %s294 = sadd.s32 %s292, %s293
      %s295 = smul.addr %s294, 4
      %s296 = scalar_lea.vmem %s1, %s295
      %p297 = scmp.lt.s32.totalorder %s20, 1
      %s298 = scalar_select %p297, %s20, 1
      %p299 = scmp.lt.s32.totalorder %s21, 3
      %s300 = scalar_select %p299, %s21, 3
      %p301 = scmp.lt.s32.totalorder %s23, 0
      %s302 = scalar_select %p301, %s23, 0
      %s303 = sadd.s32 %s302, %s300
      %s304 = smul.addr %s298, 4
      %s305 = sadd.s32 %s303, %s304
      %s306 = smul.addr %s305, 4
      %s307 = scalar_lea.vmem %s2, %s306
      %p308 = scmp.lt.s32.totalorder %s20, 1
      %s309 = scalar_select %p308, %s20, 1
      %p310 = scmp.lt.s32.totalorder %s21, 3
      %s311 = scalar_select %p310, %s21, 3
      %p312 = scmp.lt.s32.totalorder %s22, 0
      %s313 = scalar_select %p312, %s22, 0
      %s314 = sadd.s32 %s313, %s311
      %s315 = smul.addr %s309, 4
      %s316 = sadd.s32 %s314, %s315
      %s317 = smul.addr %s316, 4
      %s318 = scalar_lea.vmem %s3, %s317
      %p320 = scmp.eq.s32.totalorder %s23, 0
      // Predicated region
      $region33: #{_vit_block_impl.4} parent=31 // pred_check
        %p321 = pneg %p320
      $region34: #{_vit_block_impl.4} parent=31 // pred_check_branch
        %323 = sbr.rel (%p321) target = $region36
      $region35: #{_vit_block_impl.4} parent=31 // pred_region
        %vm324 = vcmask 7168
        %325 = vst.msk [vmem:[#allocation2] sm:$0xff] %vm324, -inf
        %326 = vst.msk [vmem:[#allocation3] sm:$0xff] %vm324, 0.0
        %vm327 = vcmask 64512
        %328 = vst.msk [vmem:[#allocation4] sm:$0xff] %vm327, 0.0
      $region36: #{_vit_block_impl.4} parent=31 // pred_fallthru
        _
      %v329 = vld [vmem:[%s285] sm:$0xf]
      %v330 = vld [vmem:[%s296] sm:$0xf]
      %v331 = vld [vmem:[%s307] sm:$0xf]
      %vm332 = vcmask 64512
      %v334 = vsel %vm332, %v329, 0
      %v337 = vsel %vm332, %v330, 0
      %339 = vmatprep.subr.bf16.mxu0 0
      %340 = vmatpush1.bf16.xpose.msra.mxu0 %v337
      %341 = vmatprep.subr.bf16.mxu0 0
      %342 = vmatpush1.bf16.xpose.msra.mxu0 0
      %343 = vmatprep.subr.bf16.mxu0 0
      %344 = vmatpush1.bf16.xpose.msra.mxu0 0
      %345 = vmatprep.subr.bf16.mxu0 0
      %346 = vmatpush1.bf16.xpose.msra.mxu0 0
      %347 = vmatprep.subr.bf16.mxu0 0
      %348 = vmatpush1.bf16.xpose.msra.mxu0 0
      %349 = vmatprep.subr.bf16.mxu0 0
      %350 = vmatpush1.bf16.xpose.msra.mxu0 0
      %351 = vmatprep.subr.bf16.mxu0 0
      %352 = vmatpush1.bf16.xpose.msra.mxu0 0
      %353 = vmatprep.subr.bf16.mxu0 0
      %354 = vmatpush1.bf16.xpose.msra.mxu0 0
      %355 = vmatprep.subr.bf16.mxu0 0
      %356 = vmatpush1.bf16.xpose.msra.mxu0 0
      %357 = vmatprep.subr.bf16.mxu0 0
      %358 = vmatpush1.bf16.xpose.msra.mxu0 0
      %359 = vmatprep.subr.bf16.mxu0 0
      %360 = vmatpush1.bf16.xpose.msra.mxu0 0
      %361 = vmatprep.subr.bf16.mxu0 0
      %362 = vmatpush1.bf16.xpose.msra.mxu0 0
      %363 = vmatprep.subr.bf16.mxu0 0
      %364 = vmatpush1.bf16.xpose.msra.mxu0 0
      %365 = vmatprep.subr.bf16.mxu0 0
      %366 = vmatpush1.bf16.xpose.msra.mxu0 0
      %367 = vmatprep.subr.bf16.mxu0 0
      %368 = vmatpush1.bf16.xpose.msra.mxu0 0
      %369 = vmatprep.subr.bf16.mxu0 0
      %370 = vmatpush1.bf16.xpose.msra.mxu0 0
      %371 = vmatprep.mubr.bf16.mxu0 0
      %372 = vmatmul.mubr.bf16.gmra.mrb[0].mxu0 %v334
      %v373 = vpop.f32.mrb[0].mxu0
      %v374 = vadd.f32 0.0, %v373
      %v375 = vpop.f32.mrb[0].mxu0
      %v376 = vpop.f32.mrb[0].mxu0
      %v377 = vpop.f32.mrb[0].mxu0
      %378 = vdwg.mxu0
      %v379 = vmul.f32 %v374, 0.35355338
      %v380 = vld [vmem:[#allocation2] sm:$0xff]
      %v381 = vsel %vm332, %v379, -inf
      %382 = vmax.xlane.f32.xlu0 %v381
      %v383 = vpop.xlane.xlu0 %382
      %v384 = vmax.f32 %v380, %v383
      %v385 = vsub.f32 %v380, %v384
      %v386 = vmul.f32 %v385, 1.442695
      %v387 = vpow.pop %v386
      %389 = vset.pattern.permute.xlu0 0
      %390 = vperm.xlu0 %389, %v384
      %v391 = vpop.permute.xlu0 %390
      %v393 = vsub.f32 %v379, %v391
      %v394 = vmul.f32 %v393, 1.442695
      %v395 = vpow.pop %v394
      %v396 = vld [vmem:[#allocation3] sm:$0xff]
      %v397 = vmul.f32 %v387, %v396
      %v398 = vsel %vm332, %v395, 0.0
      %399 = vadd.xlane.f32.xlu0 %v398
      %v400 = vpop.xlane.xlu0 %399
      %v401 = vadd.f32 %v397, %v400
      %vm402 = vcmask 7168
      %403 = vst.msk [vmem:[#allocation3] sm:$0xff] %vm402, %v401
      %v404 = vld [vmem:[#allocation4] sm:$0xff]
      %406 = vset.pattern.permute.xlu0 0
      %407 = vperm.xlu0 %406, %v387
      %v408 = vpop.permute.xlu0 %407
      %v410 = vmul.f32 %v408, %v404
      %v411 = vpack.c.bf16 %v395, %v395
      %v413 = vsel %vm332, %v411, 0
      %vm415 = vcmask 1043456
      %v417 = vsel %vm415, %v331, 0
      %419 = vmatprep.subr.bf16.mxu0 0
      %420 = vmatpush1.bf16.msra.mxu0 %v417
      %421 = vmatprep.subr.bf16.mxu0 0
      %422 = vmatpush1.bf16.msra.mxu0 0
      %423 = vmatprep.subr.bf16.mxu0 0
      %424 = vmatpush1.bf16.msra.mxu0 0
      %425 = vmatprep.subr.bf16.mxu0 0
      %426 = vmatpush1.bf16.msra.mxu0 0
      %427 = vmatprep.subr.bf16.mxu0 0
      %428 = vmatpush1.bf16.msra.mxu0 0
      %429 = vmatprep.subr.bf16.mxu0 0
      %430 = vmatpush1.bf16.msra.mxu0 0
      %431 = vmatprep.subr.bf16.mxu0 0
      %432 = vmatpush1.bf16.msra.mxu0 0
      %433 = vmatprep.subr.bf16.mxu0 0
      %434 = vmatpush1.bf16.msra.mxu0 0
      %435 = vmatprep.subr.bf16.mxu0 0
      %436 = vmatpush1.bf16.msra.mxu0 0
      %437 = vmatprep.subr.bf16.mxu0 0
      %438 = vmatpush1.bf16.msra.mxu0 0
      %439 = vmatprep.subr.bf16.mxu0 0
      %440 = vmatpush1.bf16.msra.mxu0 0
      %441 = vmatprep.subr.bf16.mxu0 0
      %442 = vmatpush1.bf16.msra.mxu0 0
      %443 = vmatprep.subr.bf16.mxu0 0
      %444 = vmatpush1.bf16.msra.mxu0 0
      %445 = vmatprep.subr.bf16.mxu0 0
      %446 = vmatpush1.bf16.msra.mxu0 0
      %447 = vmatprep.subr.bf16.mxu0 0
      %448 = vmatpush1.bf16.msra.mxu0 0
      %449 = vmatprep.subr.bf16.mxu0 0
      %450 = vmatpush1.bf16.msra.mxu0 0
      %451 = vmatprep.mubr.bf16.mxu0 0
      %452 = vmatmul.mubr.bf16.gmra.mrb[0].mxu0 %v413
      %v453 = vpop.f32.mrb[0].mxu0
      %v454 = vadd.f32 0.0, %v453
      %v455 = vpop.f32.mrb[0].mxu0
      %v456 = vpop.f32.mrb[0].mxu0
      %v457 = vpop.f32.mrb[0].mxu0
      %458 = vdwg.mxu0
      %v459 = vadd.f32 %v410, %v454
      %460 = vst.msk [vmem:[#allocation4] sm:$0xff] %vm332, %v459
      %461 = vst.msk [vmem:[#allocation2] sm:$0xff] %vm402, %v384
      // Predicated region
      $region37: #{_vit_block_impl.4} parent=31 // pred_check
        %p462 = pneg %p320
      $region38: #{_vit_block_impl.4} parent=31 // pred_check_branch
        %464 = sbr.rel (%p462) target = $region40
      $region39: #{_vit_block_impl.4} parent=31 // pred_region
        %v465 = vld [vmem:[#allocation3] sm:$0xff]
        %v466 = vrcp.pop %v465
        %v467 = vld [vmem:[#allocation4] sm:$0xff]
        %469 = vset.pattern.permute.xlu0 0
        %470 = vperm.xlu0 %469, %v466
        %v471 = vpop.permute.xlu0 %470
        %v473 = vmul.f32 %v467, %v471
        %v474 = vpack.c.bf16 %v473, %v473
        %vm475 = vcmask 60416
        %476 = vst.msk [vmem:[%s318] sm:$0xf] %vm475, %v474
      $region40: #{_vit_block_impl.4} parent=31 // pred_fallthru
        _
      %p477 = scmp.lt.s32.totalorder %s20, 1
      %s478 = scalar_select %p477, %s20, 1
      %p479 = scmp.lt.s32.totalorder %s21, 3
      %s480 = scalar_select %p479, %s21, 3
      %p481 = scmp.lt.s32.totalorder %s22, 0
      %s482 = scalar_select %p481, %s22, 0
      %s483 = sadd.s32 %s482, %s480
      %s484 = smul.addr %s478, 4
      %s485 = sadd.s32 %s483, %s484
      %s486 = smul.addr %s485, 4
      %s487 = scalar_lea.vmem %s3, %s486
      // Predicated region
      $region41: #{_vit_block_impl.4} parent=31 // pred_check
        %p488 = pneg %p152
      $region42: #{_vit_block_impl.4} parent=31 // pred_check_branch
        %490 = sbr.rel (%p488) target = $region44
      $region43: #{_vit_block_impl.4} parent=31 // pred_region
        _
      $region44: #{_vit_block_impl.4} parent=31 // pred_fallthru
        _
    $region32: #{_vit_block_impl.4} parent=5 // pred_fallthru
      _
    %p491 = scmp.le.s32.totalorder 2, %s9
    // Predicated region
    $region45: #{_vit_block_impl.4} parent=5 // pred_check
      %p492 = pneg %p491
    $region46: #{_vit_block_impl.4} parent=5 // pred_check_branch
      %494 = sbr.rel (%p492) target = $region48
    $region47: #{_vit_block_impl.4} parent=5 // pred_region
      %s495 = ssub.s32 %s9, 2
      // Predicated region
      $region49: #{_vit_block_impl.4} parent=47 // pred_check
        %p496 = pneg %p158
      $region50: #{_vit_block_impl.4} parent=47 // pred_check_branch
        %498 = sbr.rel (%p496) target = $region52
      $region51: #{_vit_block_impl.4} parent=47 // pred_region
        %p499 = scmp.lt.s32.totalorder %s24, 1
        %s500 = scalar_select %p499, %s24, 1
        %p501 = scmp.lt.s32.totalorder %s25, 3
        %s502 = scalar_select %p501, %s25, 3
        %p503 = scmp.lt.s32.totalorder %s26, 0
        %s504 = scalar_select %p503, %s26, 0
        %s505 = sadd.s32 %s504, %s502
        %s506 = smul.addr %s500, 4
        %s507 = sadd.s32 %s505, %s506
        %s508 = smul.addr %s507, 4
        %s509 = scalar_lea.vmem %s3, %s508
      $region52: #{_vit_block_impl.4} parent=47 // pred_fallthru
        _
    $region48: #{_vit_block_impl.4} parent=5 // pred_fallthru
      _
  $region6: #{_vit_block_impl.4} parent=0 // loop_footer
    %s13 = sadd.s32 1, %s9
  $region7: #{_vit_block_impl.4} parent=0 // loop_footer_branch
    %8 = sbr.rel target = $region3
  $region8: #{_vit_block_impl.4} parent=0 // loop_exit
    _

// kernel: _vit_block_impl.5
$region0: #{_vit_block_impl.5}
  #allocation0 [shape = 'u32[]', space=smem, size = 0x4, offset = 0x4, fixed_abs, tag = 'smem constant byte address 0x4 - core index']
  #allocation1 [shape = 'u32[144,128]{1,0:T(1,128)}', space=vmem, size = 0x12000, scoped, tag = 'internal scratch']
  #allocation2 [shape = 'f32[8,32]{1,0:T(8,128)}', space=vmem, size = 0x1000, scoped, tag = 'scratch operand']
  #allocation3 [shape = 'bf16[8,32]{1,0:T(8,128)(2,1)}', space=vmem, size = 0x800, scoped, tag = 'scratch operand']
  #allocation4 [shape = 'f32[8,32]{1,0:T(8,128)}', space=vmem, size = 0x1000, scoped, tag = 'scratch operand']
  %s0 = inlined_call_operand.vmem [shape: f32[2,8,32], index: 0, kind: input, shape index: {}]
  %s1 = inlined_call_operand.vmem [shape: bf16[2,8,32], index: 1, kind: input, shape index: {}]
  %s2 = inlined_call_operand.vmem [shape: bf16[32,32], index: 2, kind: input, shape index: {}]
  %s3 = inlined_call_operand.vmem [shape: f32[1,32], index: 3, kind: input, shape index: {}]
  %s4 = inlined_call_operand.vmem [shape: f32[1,32], index: 4, kind: input, shape index: {}]
  %s5 = inlined_call_operand.vmem [shape: f32[1,32], index: 5, kind: input, shape index: {}]
  %s6 = inlined_call_operand.vmem [shape: bf16[32,128], index: 6, kind: input, shape index: {}]
  %s7 = inlined_call_operand.vmem [shape: f32[1,128], index: 7, kind: input, shape index: {}]
  %s8 = inlined_call_operand.vmem [shape: bf16[128,32], index: 8, kind: input, shape index: {}]
  %s9 = inlined_call_operand.vmem [shape: f32[1,32], index: 9, kind: input, shape index: {}]
  %s10 = inlined_call_operand.hbm [shape: f32[2,8,32], index: 10, kind: output, shape index: {}]
  %s11 = sld [smem:[#allocation0]]
  $region81: #{_vit_block_impl.5} parent=0
    _
  %s13 = ssub.s32 1, %s11
  %s14 = scalar_select 0, %s13, %s11
  $region1: #{_vit_block_impl.5} parent=0
    #allocation5 [shape = 'u8[8192]{0}', space=vmem, size = 0x2000, scoped, tag = 'output window, operand 0']
    #allocation6 [shape = 's32[2]{0}', space=sflag, size = 0x8, scoped, tag = 'scoped memory for _vit_block_impl.5']
    %15 = vsyncpa [#allocation6], 0
    %s16 = scalar_lea.sflag [#allocation6], 1
    %17 = vsyncpa %s16, 0
    loop: start=0, step=1, limit=4
    $region2: #{_vit_block_impl.5} parent=1 // loop_pre_header
      _
    $region3: #{_vit_block_impl.5} parent=1 // loop_header
      %s19 = sphi 0, %s23
      %p20 = scmp.ge.s32.totalorder %s19, 4
      %s26 = sphi 0, %s45
      %s27 = sphi 0, %s41
      %s28 = sphi 0, %s37
      %s29 = sphi 0, %s26
      %s30 = sphi 0, %s27
      %s31 = sphi 0, %s28
      %s32 = sphi 0, %s29
      %s33 = sphi 0, %s30
      %s34 = sphi 0, %s31
      %s50 = sphi 0, %s52
      %s53 = sphi 0, %s50
      %s54 = sphi 0, %s53
      %s70 = sphi 0, %s54
      %s78 = sphi 0, %s80
      %s81 = sphi 0, %s78
      %s82 = sphi 0, %s81
      %s98 = sphi 0, %s82
      %s102 = sphi 0, %s102
      %s104 = sphi 0, %s102
      %s105 = sphi 0, %s104
      %s119 = sphi 0, %s105
      %s123 = sphi 0, %s123
      %s125 = sphi 0, %s123
      %s126 = sphi 0, %s125
      %s140 = sphi 0, %s126
      %s144 = sphi 0, %s144
      %s146 = sphi 0, %s144
      %s147 = sphi 0, %s146
      %s161 = sphi 0, %s147
      %s165 = sphi 0, %s165
      %s167 = sphi 0, %s165
      %s168 = sphi 0, %s167
      %s182 = sphi 0, %s168
      %s188 = sphi 0, %s190
      %s191 = sphi 0, %s188
      %s192 = sphi 0, %s191
      %s208 = sphi 0, %s192
      %s214 = sphi 0, %s216
      %s217 = sphi 0, %s214
      %s218 = sphi 0, %s217
      %s234 = sphi 0, %s218
      %s240 = sphi 0, %s242
      %s243 = sphi 0, %s240
      %s244 = sphi 0, %s243
      %s260 = sphi 0, %s244
      %s264 = sphi 0, %s264
      %s266 = sphi 0, %s264
      %s267 = sphi 0, %s266
      %s281 = sphi 0, %s267
      %s289 = sphi 0, %s291
      %s292 = sphi 0, %s289
      %s293 = sphi 0, %s292
      %s309 = sphi 0, %s293
    $region4: #{_vit_block_impl.5} parent=1 // loop_header_branch
      %22 = sbr.rel (%p20) target = $region8
    $region5: #{_vit_block_impl.5} parent=1 // loop_body
      %s24 = ssub.s32 %s19, 1
      %s25 = ssub.s32 %s19, 2
      %s35 = sadd.s32 1, %s28
      %p36 = scmp.ge.s32.totalorder %s35, 1
      %s37 = scalar_select %p36, 0, %s35
      %s38 = sadd.s32 1, %s27
      %s39 = scalar_select %p36, %s38, %s27
      %p40 = scmp.ge.s32.totalorder %s39, 1
      %s41 = scalar_select %p40, 0, %s39
      %s42 = sadd.s32 1, %s26
      %s43 = scalar_select %p40, %s42, %s26
      %p44 = scmp.ge.s32.totalorder %s43, 2
      %s45 = scalar_select %p44, 0, %s43
      %s46 = ssub.s32 %s26, %s45
      %s47 = ssub.s32 %s27, %s41
      %s48 = sor.u32 %s46, %s47
      %p49 = scmp.eq.s32.totalorder %s48, 0
      %s51 = sadd.s32 %s50, 1
      %s52 = scalar_select %p49, %s50, %s51
      %p55 = pneg %p49
      %p56 = scmp.eq.s32.totalorder %s19, 1
      %p57 = por %p55, %p56
      %p58 = scmp.ne.s32.totalorder %s50, %s53
      %p59 = scmp.eq.s32.totalorder %s19, 0
      %p60 = por %p58, %p59
      %p61 = scmp.ne.s32.totalorder %s50, %s53
      %p62 = scmp.eq.s32.totalorder %s24, 1
      %p63 = por %p61, %p62
      %p64 = scmp.ne.s32.totalorder %s53, %s54
      %p65 = scmp.eq.s32.totalorder %s24, 0
      %p66 = por %p64, %p65
      %p67 = scmp.ne.s32.totalorder %s53, %s54
      %p68 = scmp.eq.s32.totalorder %s25, 1
      %p69 = por %p67, %p68
      %p71 = scmp.ne.s32.totalorder %s54, %s70
      %p72 = scmp.eq.s32.totalorder %s25, 0
      %p73 = por %p71, %p72
      %s74 = ssub.s32 %s26, %s45
      %s75 = ssub.s32 %s27, %s41
      %s76 = sor.u32 %s74, %s75
      %p77 = scmp.eq.s32.totalorder %s76, 0
      %s79 = sadd.s32 %s78, 1
      %s80 = scalar_select %p77, %s78, %s79
      %p83 = pneg %p77
      %p84 = scmp.eq.s32.totalorder %s19, 1
      %p85 = por %p83, %p84
      %p86 = scmp.ne.s32.totalorder %s78, %s81
      %p87 = scmp.eq.s32.totalorder %s19, 0
      %p88 = por %p86, %p87
      %p89 = scmp.ne.s32.totalorder %s78, %s81
      %p90 = scmp.eq.s32.totalorder %s24, 1
      %p91 = por %p89, %p90
      %p92 = scmp.ne.s32.totalorder %s81, %s82
      %p93 = scmp.eq.s32.totalorder %s24, 0
      %p94 = por %p92, %p93
      %p95 = scmp.ne.s32.totalorder %s81, %s82
      %p96 = scmp.eq.s32.totalorder %s25, 1
      %p97 = por %p95, %p96
      %p99 = scmp.ne.s32.totalorder %s82, %s98
      %p100 = scmp.eq.s32.totalorder %s25, 0
      %p101 = por %p99, %p100
      %s103 = sadd.s32 %s102, 1
      %p106 = scmp.eq.s32.totalorder %s19, 1
      %p107 = scmp.ne.s32.totalorder %s102, %s104
      %p108 = scmp.eq.s32.totalorder %s19, 0
      %p109 = por %p107, %p108
      %p110 = scmp.ne.s32.totalorder %s102, %s104
      %p111 = scmp.eq.s32.totalorder %s24, 1
      %p112 = por %p110, %p111
      %p113 = scmp.ne.s32.totalorder %s104, %s105
      %p114 = scmp.eq.s32.totalorder %s24, 0
      %p115 = por %p113, %p114
      %p116 = scmp.ne.s32.totalorder %s104, %s105
      %p117 = scmp.eq.s32.totalorder %s25, 1
      %p118 = por %p116, %p117
      %p120 = scmp.ne.s32.totalorder %s105, %s119
      %p121 = scmp.eq.s32.totalorder %s25, 0
      %p122 = por %p120, %p121
      %s124 = sadd.s32 %s123, 1
      %p127 = scmp.eq.s32.totalorder %s19, 1
      %p128 = scmp.ne.s32.totalorder %s123, %s125
      %p129 = scmp.eq.s32.totalorder %s19, 0
      %p130 = por %p128, %p129
      %p131 = scmp.ne.s32.totalorder %s123, %s125
      %p132 = scmp.eq.s32.totalorder %s24, 1
      %p133 = por %p131, %p132
      %p134 = scmp.ne.s32.totalorder %s125, %s126
      %p135 = scmp.eq.s32.totalorder %s24, 0
      %p136 = por %p134, %p135
      %p137 = scmp.ne.s32.totalorder %s125, %s126
      %p138 = scmp.eq.s32.totalorder %s25, 1
      %p139 = por %p137, %p138
      %p141 = scmp.ne.s32.totalorder %s126, %s140
      %p142 = scmp.eq.s32.totalorder %s25, 0
      %p143 = por %p141, %p142
      %s145 = sadd.s32 %s144, 1
      %p148 = scmp.eq.s32.totalorder %s19, 1
      %p149 = scmp.ne.s32.totalorder %s144, %s146
      %p150 = scmp.eq.s32.totalorder %s19, 0
      %p151 = por %p149, %p150
      %p152 = scmp.ne.s32.totalorder %s144, %s146
      %p153 = scmp.eq.s32.totalorder %s24, 1
      %p154 = por %p152, %p153
      %p155 = scmp.ne.s32.totalorder %s146, %s147
      %p156 = scmp.eq.s32.totalorder %s24, 0
      %p157 = por %p155, %p156
      %p158 = scmp.ne.s32.totalorder %s146, %s147
      %p159 = scmp.eq.s32.totalorder %s25, 1
      %p160 = por %p158, %p159
      %p162 = scmp.ne.s32.totalorder %s147, %s161
      %p163 = scmp.eq.s32.totalorder %s25, 0
      %p164 = por %p162, %p163
      %s166 = sadd.s32 %s165, 1
      %p169 = scmp.eq.s32.totalorder %s19, 1
      %p170 = scmp.ne.s32.totalorder %s165, %s167
      %p171 = scmp.eq.s32.totalorder %s19, 0
      %p172 = por %p170, %p171
      %p173 = scmp.ne.s32.totalorder %s165, %s167
      %p174 = scmp.eq.s32.totalorder %s24, 1
      %p175 = por %p173, %p174
      %p176 = scmp.ne.s32.totalorder %s167, %s168
      %p177 = scmp.eq.s32.totalorder %s24, 0
      %p178 = por %p176, %p177
      %p179 = scmp.ne.s32.totalorder %s167, %s168
      %p180 = scmp.eq.s32.totalorder %s25, 1
      %p181 = por %p179, %p180
      %p183 = scmp.ne.s32.totalorder %s168, %s182
      %p184 = scmp.eq.s32.totalorder %s25, 0
      %p185 = por %p183, %p184
      %s186 = ssub.s32 %s28, %s37
      %p187 = scmp.eq.s32.totalorder %s186, 0
      %s189 = sadd.s32 %s188, 1
      %s190 = scalar_select %p187, %s188, %s189
      %p193 = pneg %p187
      %p194 = scmp.eq.s32.totalorder %s19, 1
      %p195 = por %p193, %p194
      %p196 = scmp.ne.s32.totalorder %s188, %s191
      %p197 = scmp.eq.s32.totalorder %s19, 0
      %p198 = por %p196, %p197
      %p199 = scmp.ne.s32.totalorder %s188, %s191
      %p200 = scmp.eq.s32.totalorder %s24, 1
      %p201 = por %p199, %p200
      %p202 = scmp.ne.s32.totalorder %s191, %s192
      %p203 = scmp.eq.s32.totalorder %s24, 0
      %p204 = por %p202, %p203
      %p205 = scmp.ne.s32.totalorder %s191, %s192
      %p206 = scmp.eq.s32.totalorder %s25, 1
      %p207 = por %p205, %p206
      %p209 = scmp.ne.s32.totalorder %s192, %s208
      %p210 = scmp.eq.s32.totalorder %s25, 0
      %p211 = por %p209, %p210
      %s212 = ssub.s32 %s28, %s37
      %p213 = scmp.eq.s32.totalorder %s212, 0
      %s215 = sadd.s32 %s214, 1
      %s216 = scalar_select %p213, %s214, %s215
      %p219 = pneg %p213
      %p220 = scmp.eq.s32.totalorder %s19, 1
      %p221 = por %p219, %p220
      %p222 = scmp.ne.s32.totalorder %s214, %s217
      %p223 = scmp.eq.s32.totalorder %s19, 0
      %p224 = por %p222, %p223
      %p225 = scmp.ne.s32.totalorder %s214, %s217
      %p226 = scmp.eq.s32.totalorder %s24, 1
      %p227 = por %p225, %p226
      %p228 = scmp.ne.s32.totalorder %s217, %s218
      %p229 = scmp.eq.s32.totalorder %s24, 0
      %p230 = por %p228, %p229
      %p231 = scmp.ne.s32.totalorder %s217, %s218
      %p232 = scmp.eq.s32.totalorder %s25, 1
      %p233 = por %p231, %p232
      %p235 = scmp.ne.s32.totalorder %s218, %s234
      %p236 = scmp.eq.s32.totalorder %s25, 0
      %p237 = por %p235, %p236
      %s238 = ssub.s32 %s28, %s37
      %p239 = scmp.eq.s32.totalorder %s238, 0
      %s241 = sadd.s32 %s240, 1
      %s242 = scalar_select %p239, %s240, %s241
      %p245 = pneg %p239
      %p246 = scmp.eq.s32.totalorder %s19, 1
      %p247 = por %p245, %p246
      %p248 = scmp.ne.s32.totalorder %s240, %s243
      %p249 = scmp.eq.s32.totalorder %s19, 0
      %p250 = por %p248, %p249
      %p251 = scmp.ne.s32.totalorder %s240, %s243
      %p252 = scmp.eq.s32.totalorder %s24, 1
      %p253 = por %p251, %p252
      %p254 = scmp.ne.s32.totalorder %s243, %s244
      %p255 = scmp.eq.s32.totalorder %s24, 0
      %p256 = por %p254, %p255
      %p257 = scmp.ne.s32.totalorder %s243, %s244
      %p258 = scmp.eq.s32.totalorder %s25, 1
      %p259 = por %p257, %p258
      %p261 = scmp.ne.s32.totalorder %s244, %s260
      %p262 = scmp.eq.s32.totalorder %s25, 0
      %p263 = por %p261, %p262
      %s265 = sadd.s32 %s264, 1
      %p268 = scmp.eq.s32.totalorder %s19, 1
      %p269 = scmp.ne.s32.totalorder %s264, %s266
      %p270 = scmp.eq.s32.totalorder %s19, 0
      %p271 = por %p269, %p270
      %p272 = scmp.ne.s32.totalorder %s264, %s266
      %p273 = scmp.eq.s32.totalorder %s24, 1
      %p274 = por %p272, %p273
      %p275 = scmp.ne.s32.totalorder %s266, %s267
      %p276 = scmp.eq.s32.totalorder %s24, 0
      %p277 = por %p275, %p276
      %p278 = scmp.ne.s32.totalorder %s266, %s267
      %p279 = scmp.eq.s32.totalorder %s25, 1
      %p280 = por %p278, %p279
      %p282 = scmp.ne.s32.totalorder %s267, %s281
      %p283 = scmp.eq.s32.totalorder %s25, 0
      %p284 = por %p282, %p283
      %s285 = ssub.s32 %s26, %s45
      %s286 = ssub.s32 %s27, %s41
      %s287 = sor.u32 %s285, %s286
      %p288 = scmp.eq.s32.totalorder %s287, 0
      %s290 = sadd.s32 %s289, 1
      %s291 = scalar_select %p288, %s289, %s290
      %p294 = pneg %p288
      %p295 = scmp.eq.s32.totalorder %s19, 1
      %p296 = por %p294, %p295
      %p297 = scmp.ne.s32.totalorder %s289, %s292
      %p298 = scmp.eq.s32.totalorder %s19, 0
      %p299 = por %p297, %p298
      %p300 = scmp.ne.s32.totalorder %s289, %s292
      %p301 = scmp.eq.s32.totalorder %s24, 1
      %p302 = por %p300, %p301
      %p303 = scmp.ne.s32.totalorder %s292, %s293
      %p304 = scmp.eq.s32.totalorder %s24, 0
      %p305 = por %p303, %p304
      %p306 = scmp.ne.s32.totalorder %s292, %s293
      %p307 = scmp.eq.s32.totalorder %s25, 1
      %p308 = por %p306, %p307
      %p310 = scmp.ne.s32.totalorder %s293, %s309
      %p311 = scmp.eq.s32.totalorder %s25, 0
      %p312 = por %p310, %p311
      %p313 = scmp.le.s32.totalorder 1, %s19
      %p314 = scmp.lt.s32.totalorder %s19, 3
      %p315 = pnand %p313, %p314
      %p316 = pneg %p315
      // Predicated region
      $region9: #{_vit_block_impl.5} parent=5 // pred_check
        _
      $region10: #{_vit_block_impl.5} parent=5 // pred_check_branch
        %318 = sbr.rel (%p315) target = $region12
      $region11: #{_vit_block_impl.5} parent=5 // pred_region
        %s319 = ssub.s32 %s19, 1
        // Predicated region
        $region13: #{_vit_block_impl.5} parent=11 // pred_check
          %p320 = pneg %p115
        $region14: #{_vit_block_impl.5} parent=11 // pred_check_branch
          %322 = sbr.rel (%p320) target = $region16
        $region15: #{_vit_block_impl.5} parent=11 // pred_region
          _
        $region16: #{_vit_block_impl.5} parent=11 // pred_fallthru
          _
        // Predicated region
        $region17: #{_vit_block_impl.5} parent=11 // pred_check
          %p323 = pneg %p136
        $region18: #{_vit_block_impl.5} parent=11 // pred_check_branch
          %325 = sbr.rel (%p323) target = $region20
        $region19: #{_vit_block_impl.5} parent=11 // pred_region
          _
        $region20: #{_vit_block_impl.5} parent=11 // pred_fallthru
          _
        // Predicated region
        $region21: #{_vit_block_impl.5} parent=11 // pred_check
          %p326 = pneg %p157
        $region22: #{_vit_block_impl.5} parent=11 // pred_check_branch
          %328 = sbr.rel (%p326) target = $region24
        $region23: #{_vit_block_impl.5} parent=11 // pred_region
          _
        $region24: #{_vit_block_impl.5} parent=11 // pred_fallthru
          _
        // Predicated region
        $region25: #{_vit_block_impl.5} parent=11 // pred_check
          %p329 = pneg %p178
        $region26: #{_vit_block_impl.5} parent=11 // pred_check_branch
          %331 = sbr.rel (%p329) target = $region28
        $region27: #{_vit_block_impl.5} parent=11 // pred_region
          _
        $region28: #{_vit_block_impl.5} parent=11 // pred_fallthru
          _
        // Predicated region
        $region29: #{_vit_block_impl.5} parent=11 // pred_check
          %p332 = pneg %p204
        $region30: #{_vit_block_impl.5} parent=11 // pred_check_branch
          %334 = sbr.rel (%p332) target = $region32
        $region31: #{_vit_block_impl.5} parent=11 // pred_region
          %p335 = scmp.lt.s32.totalorder %s31, 0
          %s336 = scalar_select %p335, %s31, 0
          %s337 = smul.addr %s336, 4
          %s338 = scalar_lea.vmem %s6, %s337
        $region32: #{_vit_block_impl.5} parent=11 // pred_fallthru
          _
        // Predicated region
        $region33: #{_vit_block_impl.5} parent=11 // pred_check
          %p339 = pneg %p230
        $region34: #{_vit_block_impl.5} parent=11 // pred_check_branch
          %341 = sbr.rel (%p339) target = $region36
        $region35: #{_vit_block_impl.5} parent=11 // pred_region
          %p342 = scmp.lt.s32.totalorder %s31, 0
          %s343 = scalar_select %p342, %s31, 0
          %s344 = scalar_lea.vmem %s7, %s343
        $region36: #{_vit_block_impl.5} parent=11 // pred_fallthru
          _
        // Predicated region
        $region37: #{_vit_block_impl.5} parent=11 // pred_check
          %p345 = pneg %p256
        $region38: #{_vit_block_impl.5} parent=11 // pred_check_branch
          %347 = sbr.rel (%p345) target = $region40
        $region39: #{_vit_block_impl.5} parent=11 // pred_region
          %s348 = smul.u32 16, %s31
          %p349 = scmp.lt.s32.totalorder %s348, 15
          %s350 = scalar_select %p349, %s348, 15
          %s351 = smul.addr %s350, 4
          %s352 = scalar_lea.vmem %s8, %s351
          %s353 = smul.u32 16, %s31
        $region40: #{_vit_block_impl.5} parent=11 // pred_fallthru
          _
        // Predicated region
        $region41: #{_vit_block_impl.5} parent=11 // pred_check
          %p354 = pneg %p277
        $region42: #{_vit_block_impl.5} parent=11 // pred_check_branch
          %356 = sbr.rel (%p354) target = $region44
        $region43: #{_vit_block_impl.5} parent=11 // pred_region
          _
        $region44: #{_vit_block_impl.5} parent=11 // pred_fallthru
          _
      $region12: #{_vit_block_impl.5} parent=5 // pred_fallthru
        _
      %p357 = scmp.lt.s32.totalorder %s19, 2
      // Predicated region
      $region45: #{_vit_block_impl.5} parent=5 // pred_check
        %p358 = pneg %p357
      $region46: #{_vit_block_impl.5} parent=5 // pred_check_branch
        %360 = sbr.rel (%p358) target = $region48
      $region47: #{_vit_block_impl.5} parent=5 // pred_region
        // Predicated region
        $region49: #{_vit_block_impl.5} parent=47 // pred_check
          %p361 = pneg %p60
        $region50: #{_vit_block_impl.5} parent=47 // pred_check_branch
          %363 = sbr.rel (%p361) target = $region52
        $region51: #{_vit_block_impl.5} parent=47 // pred_region
          %p364 = scmp.lt.s32.totalorder %s26, 1
          %s365 = scalar_select %p364, %s26, 1
          %p366 = scmp.lt.s32.totalorder %s27, 0
          %s367 = scalar_select %p366, %s27, 0
          %s368 = sadd.s32 %s367, %s365
          %s369 = smul.addr %s368, 8
          %s370 = scalar_lea.vmem %s0, %s369
        $region52: #{_vit_block_impl.5} parent=47 // pred_fallthru
          _
        // Predicated region
        $region53: #{_vit_block_impl.5} parent=47 // pred_check
          %p371 = pneg %p88
        $region54: #{_vit_block_impl.5} parent=47 // pred_check_branch
          %373 = sbr.rel (%p371) target = $region56
        $region55: #{_vit_block_impl.5} parent=47 // pred_region
          %p374 = scmp.lt.s32.totalorder %s26, 1
          %s375 = scalar_select %p374, %s26, 1
          %p376 = scmp.lt.s32.totalorder %s27, 0
          %s377 = scalar_select %p376, %s27, 0
          %s378 = sadd.s32 %s377, %s375
          %s379 = smul.addr %s378, 4
          %s380 = scalar_lea.vmem %s1, %s379
        $region56: #{_vit_block_impl.5} parent=47 // pred_fallthru
          _
      $region48: #{_vit_block_impl.5} parent=5 // pred_fallthru
        _
      %p381 = scmp.le.s32.totalorder 1, %s19
      %p382 = scmp.lt.s32.totalorder %s19, 3
      %p383 = pnand %p381, %p382
      %p384 = pneg %p383
      // Predicated region
      $region57: #{_vit_block_impl.5} parent=5 // pred_check
        _
      $region58: #{_vit_block_impl.5} parent=5 // pred_check_branch
        %386 = sbr.rel (%p383) target = $region60
      $region59: #{_vit_block_impl.5} parent=5 // pred_region
        %s387 = ssub.s32 %s19, 1
        %p388 = scmp.lt.s32.totalorder %s29, 1
        %s389 = scalar_select %p388, %s29, 1
        %p390 = scmp.lt.s32.totalorder %s30, 0
        %s391 = scalar_select %p390, %s30, 0
        %s392 = sadd.s32 %s391, %s389
        %s393 = smul.addr %s392, 8
        %s394 = scalar_lea.vmem %s0, %s393
        %p395 = pneg %p66
        %p396 = pneg %p63
        %p397 = scmp.lt.s32.totalorder %s29, 1
        %s398 = scalar_select %p397, %s29, 1
        %p399 = scmp.lt.s32.totalorder %s30, 0
        %s400 = scalar_select %p399, %s30, 0
        %s401 = sadd.s32 %s400, %s398
        %s402 = smul.addr %s401, 4
        %s403 = scalar_lea.vmem %s1, %s402
        %p404 = pneg %p94
        %p405 = pneg %p91
        %p406 = pneg %p115
        %p407 = pneg %p112
        %p408 = pneg %p136
        %p409 = pneg %p133
        %p410 = pneg %p157
        %p411 = pneg %p154
        %p412 = pneg %p178
        %p413 = pneg %p175
        %p414 = scmp.lt.s32.totalorder %s31, 0
        %s415 = scalar_select %p414, %s31, 0
        %s416 = smul.addr %s415, 4
        %s417 = scalar_lea.vmem %s6, %s416
        %p418 = pneg %p204
        %p419 = pneg %p201
        %p420 = scmp.lt.s32.totalorder %s31, 0
        %s421 = scalar_select %p420, %s31, 0
        %s422 = scalar_lea.vmem %s7, %s421
        %p423 = pneg %p230
        %p424 = pneg %p227
        %s425 = smul.u32 16, %s31
        %p426 = scmp.lt.s32.totalorder %s425, 15
        %s427 = scalar_select %p426, %s425, 15
        %s428 = smul.addr %s427, 4
        %s429 = scalar_lea.vmem %s8, %s428
        %p430 = pneg %p256
        %p431 = pneg %p253
        %p432 = pneg %p277
        %p433 = pneg %p274
        %p434 = pneg %p305
        %p435 = pneg %p302
        %s436 = sand.u32 %s292, 1
        %s437 = scalar_lea.sflag [#allocation6], %s436
        %s438 = sand.u32 %s292, 1
        %s439 = smul.addr %s438, 8
        %s440 = scalar_lea.vmem [#allocation5], %s439
        %p441 = scmp.lt.s32.totalorder %s29, 1
        %s442 = scalar_select %p441, %s29, 1
        %p443 = scmp.lt.s32.totalorder %s30, 0
        %s444 = scalar_select %p443, %s30, 0
        %s445 = sadd.s32 %s444, %s442
        %s446 = smul.addr %s445, 8
        %s447 = scalar_lea.vmem %s0, %s446
        %p448 = scmp.lt.s32.totalorder %s29, 1
        %s449 = scalar_select %p448, %s29, 1
        %p450 = scmp.lt.s32.totalorder %s30, 0
        %s451 = scalar_select %p450, %s30, 0
        %s452 = sadd.s32 %s451, %s449
        %s453 = smul.addr %s452, 4
        %s454 = scalar_lea.vmem %s1, %s453
        %p455 = scmp.lt.s32.totalorder %s31, 0
        %s456 = scalar_select %p455, %s31, 0
        %s457 = smul.addr %s456, 4
        %s458 = scalar_lea.vmem %s6, %s457
        %p459 = scmp.lt.s32.totalorder %s31, 0
        %s460 = scalar_select %p459, %s31, 0
        %s461 = scalar_lea.vmem %s7, %s460
        %s462 = smul.u32 16, %s31
        %p463 = scmp.lt.s32.totalorder %s462, 15
        %s464 = scalar_select %p463, %s462, 15
        %s465 = smul.addr %s464, 4
        %s466 = scalar_lea.vmem %s8, %s465
        %s467 = smul.u32 16, %s31
        %p469 = scmp.eq.s32.totalorder %s31, 0
        // Predicated region
        $region61: #{_vit_block_impl.5} parent=59 // pred_check
          %p470 = pneg %p469
        $region62: #{_vit_block_impl.5} parent=59 // pred_check_branch
          %472 = sbr.rel (%p470) target = $region64
        $region63: #{_vit_block_impl.5} parent=59 // pred_region
          %v473 = vld [vmem:[%s454] sm:$0xf]
          %v474 = vld [vmem:[%s2] sm:$0xf]
          %v475 = vld [vmem:[%s2 + $0x4] sm:$0xf]
          %v476 = vld [vmem:[%s2 + $0x8] sm:$0xf]
          %v477 = vld [vmem:[%s2 + $0xc] sm:$0xf]
          %v478 = vld [vmem:[%s3] sm:$0x1]
          %v480 = vlaneseq
          %v481 = vshrl.u32 %v480, 7
          %v482 = vsub.s32 0, %v481
          %v483 = vrot.slane %v478, %v482
          %v489 = vunpack.c.l.b16 %v474
          %v490 = vunpack.c.l.b16 %v475
          %v491 = vunpack.c.l.b16 %v476
          %v492 = vunpack.c.l.b16 %v477
          %v493 = vpack.c.b16 %v490, %v489
          %v494 = vpack.c.b16 %v492, %v491
          %vm497 = vcmask 261120
          %v499 = vsel %vm497, %v473, 0
          %501 = vmatprep.subr.bf16.mxu0 0
          %502 = vmatpush1.bf16.msra.mxu0 %v493
          %503 = vmatprep.subr.bf16.mxu0 0
          %504 = vmatpush1.bf16.msra.mxu0 %v494
          %505 = vmatprep.subr.bf16.mxu0 0
          %506 = vmatpush1.bf16.msra.mxu0 0
          %507 = vmatprep.subr.bf16.mxu0 0
          %508 = vmatpush1.bf16.msra.mxu0 0
          %509 = vmatprep.subr.bf16.mxu0 0
          %510 = vmatpush1.bf16.msra.mxu0 0
          %511 = vmatprep.subr.bf16.mxu0 0
          %512 = vmatpush1.bf16.msra.mxu0 0
          %513 = vmatprep.subr.bf16.mxu0 0
          %514 = vmatpush1.bf16.msra.mxu0 0
          %515 = vmatprep.subr.bf16.mxu0 0
          %516 = vmatpush1.bf16.msra.mxu0 0
          %517 = vmatprep.subr.bf16.mxu0 0
          %518 = vmatpush1.bf16.msra.mxu0 0
          %519 = vmatprep.subr.bf16.mxu0 0
          %520 = vmatpush1.bf16.msra.mxu0 0
          %521 = vmatprep.subr.bf16.mxu0 0
          %522 = vmatpush1.bf16.msra.mxu0 0
          %523 = vmatprep.subr.bf16.mxu0 0
          %524 = vmatpush1.bf16.msra.mxu0 0
          %525 = vmatprep.subr.bf16.mxu0 0
          %526 = vmatpush1.bf16.msra.mxu0 0
          %527 = vmatprep.subr.bf16.mxu0 0
          %528 = vmatpush1.bf16.msra.mxu0 0
          %529 = vmatprep.subr.bf16.mxu0 0
          %530 = vmatpush1.bf16.msra.mxu0 0
          %531 = vmatprep.subr.bf16.mxu0 0
          %532 = vmatpush1.bf16.msra.mxu0 0
          %533 = vmatprep.mubr.bf16.mxu0 0
          %534 = vmatmul.mubr.bf16.gmra.mrb[0].mxu0 %v499
          %v535 = vpop.f32.mrb[0].mxu0
          %v536 = vadd.f32 %v483, %v535
          %v537 = vpop.f32.mrb[0].mxu0
          %v538 = vpop.f32.mrb[0].mxu0
          %v539 = vpop.f32.mrb[0].mxu0
          %540 = vdwg.mxu0
          %v541 = vld [vmem:[%s447] sm:$0xff]
          %v542 = vadd.f32 %v541, %v536
          %543 = vst.msk [vmem:[#allocation2] sm:$0xff] %vm497, %v542
          %v544 = vld [vmem:[%s4] sm:$0x1]
          %v545 = vld [vmem:[%s5] sm:$0x1]
          %v546 = vsel %vm497, %v542, 0.0
          %547 = vadd.xlane.f32.xlu0 %v546
          %v548 = vpop.xlane.xlu0 %547
          %v549 = vrcp.pop 32.0
          %v550 = vmul.f32 %v548, %v549
          %v551 = vsub.f32 %v542, %v550
          %v552 = vmul.f32 %v551, %v551
          %v553 = vsel %vm497, %v552, 0.0
          %554 = vadd.xlane.f32.xlu0 %v553
          %v555 = vpop.xlane.xlu0 %554
          %v556 = vmul.f32 %v555, %v549
          %v557 = vadd.f32 %v556, 1e-06
          %v558 = vrsqrt.pop %v557
          %v559 = vmul.f32 %v551, %v558
          %v561 = vlaneseq
          %v562 = vshrl.u32 %v561, 7
          %v563 = vsub.s32 0, %v562
          %v564 = vrot.slane %v544, %v563
          %v566 = vmul.f32 %v559, %v564
          %v568 = vlaneseq
          %v569 = vshrl.u32 %v568, 7
          %v570 = vsub.s32 0, %v569
          %v571 = vrot.slane %v545, %v570
          %v573 = vadd.f32 %v566, %v571
          %v574 = vpack.c.bf16 %v573, %v573
          %vm575 = vcmask 257024
          %576 = vst.msk [vmem:[#allocation3] sm:$0xf] %vm575, %v574
          %577 = vst.msk [vmem:[#allocation4] sm:$0xff] %vm497, 0.0
        $region64: #{_vit_block_impl.5} parent=59 // pred_fallthru
          _
        %v578 = vld [vmem:[#allocation3] sm:$0xf]
        %v579 = vld [vmem:[%s458] sm:$0xf]
        %v580 = vld [vmem:[%s458 + $0x4] sm:$0xf]
        %v581 = vld [vmem:[%s458 + $0x8] sm:$0xf]
        %v582 = vld [vmem:[%s458 + $0xc] sm:$0xf]
        %v583 = vld [vmem:[%s461] sm:$0x1]
        %v585 = vlaneseq
        %v586 = vshrl.u32 %v585, 7
        %v587 = vsub.s32 0, %v586
        %v588 = vrot.slane %v583, %v587
        %v594 = vunpack.c.l.b16 %v579
        %v595 = vunpack.c.l.b16 %v580
        %v596 = vunpack.c.l.b16 %v581
        %v597 = vunpack.c.l.b16 %v582
        %v598 = vpack.c.b16 %v595, %v594
        %v599 = vpack.c.b16 %v597, %v596
        %vm602 = vcmask 261120
        %v604 = vsel %vm602, %v578, 0
        %606 = vmatprep.subr.bf16.mxu0 0
        %607 = vmatpush1.bf16.msra.mxu0 %v598
        %608 = vmatprep.subr.bf16.mxu0 0
        %609 = vmatpush1.bf16.msra.mxu0 %v599
        %610 = vmatprep.subr.bf16.mxu0 0
        %611 = vmatpush1.bf16.msra.mxu0 0
        %612 = vmatprep.subr.bf16.mxu0 0
        %613 = vmatpush1.bf16.msra.mxu0 0
        %614 = vmatprep.subr.bf16.mxu0 0
        %615 = vmatpush1.bf16.msra.mxu0 0
        %616 = vmatprep.subr.bf16.mxu0 0
        %617 = vmatpush1.bf16.msra.mxu0 0
        %618 = vmatprep.subr.bf16.mxu0 0
        %619 = vmatpush1.bf16.msra.mxu0 0
        %620 = vmatprep.subr.bf16.mxu0 0
        %621 = vmatpush1.bf16.msra.mxu0 0
        %622 = vmatprep.subr.bf16.mxu0 0
        %623 = vmatpush1.bf16.msra.mxu0 0
        %624 = vmatprep.subr.bf16.mxu0 0
        %625 = vmatpush1.bf16.msra.mxu0 0
        %626 = vmatprep.subr.bf16.mxu0 0
        %627 = vmatpush1.bf16.msra.mxu0 0
        %628 = vmatprep.subr.bf16.mxu0 0
        %629 = vmatpush1.bf16.msra.mxu0 0
        %630 = vmatprep.subr.bf16.mxu0 0
        %631 = vmatpush1.bf16.msra.mxu0 0
        %632 = vmatprep.subr.bf16.mxu0 0
        %633 = vmatpush1.bf16.msra.mxu0 0
        %634 = vmatprep.subr.bf16.mxu0 0
        %635 = vmatpush1.bf16.msra.mxu0 0
        %636 = vmatprep.subr.bf16.mxu0 0
        %637 = vmatpush1.bf16.msra.mxu0 0
        %638 = vmatprep.mubr.bf16.mxu0 0
        %639 = vmatmul.mubr.bf16.gmra.mrb[0].mxu0 %v604
        %v640 = vpop.f32.mrb[0].mxu0
        %v641 = vadd.f32 %v588, %v640
        %v642 = vpop.f32.mrb[0].mxu0
        %v643 = vpop.f32.mrb[0].mxu0
        %v644 = vpop.f32.mrb[0].mxu0
        %645 = vdwg.mxu0
        %v646 = vmul.f32 %v641, 0.5
        %v647 = vmul.f32 %v641, 0.70710677
        %v648 = vand.u32 2147483647, %v647
        %v649 = vmul.f32 %v648, 0.3275911
        %v650 = vadd.f32 %v649, 1.0
        %v651 = vrcp.pop %v650
        %v652 = vmul.f32 1.0, %v651
        %v653 = vmul.f32 %v652, 1.0614054
        %v654 = vadd.f32 %v653, -1.4531521
        %v655 = vmul.f32 %v654, %v652
        %v656 = vadd.f32 %v655, 1.4214138
        %v657 = vmul.f32 %v656, %v652
        %v658 = vadd.f32 %v657, -0.28449672
        %v659 = vmul.f32 %v658, %v652
        %v660 = vadd.f32 %v659, 0.2548296
        %v661 = vmul.f32 %v660, %v652
        %v662 = vsub.f32 0.0, %v648
        %v663 = vmul.f32 %v662, %v648
        %v664 = vmul.f32 %v663, 1.442695
        %v665 = vpow.pop %v664
        %v666 = vmul.f32 %v661, %v665
        %v667 = vsub.f32 1.0, %v666
        %vm668 = vcmp.ge.f32.partialorder %v647, 0.0
        %v669 = vsub.f32 0.0, %v667
        %v670 = vsel %vm668, %v667, %v669
        %v671 = vadd.f32 %v670, 1.0
        %v672 = vmul.f32 %v646, %v671
        %v673 = vld [vmem:[#allocation4] sm:$0xff]
        %v674 = vpack.c.bf16 %v672, %v672
        %v675 = vld [vmem:[%s466] sm:$0xf]
        %v676 = vld [vmem:[%s466 + $0x4] sm:$0xf]
        %v677 = vld [vmem:[%s466 + $0x8] sm:$0xf]
        %v678 = vld [vmem:[%s466 + $0xc] sm:$0xf]
        %v679 = vld [vmem:[%s466 + $0x10] sm:$0xf]
        %v680 = vld [vmem:[%s466 + $0x14] sm:$0xf]
        %v681 = vld [vmem:[%s466 + $0x18] sm:$0xf]
        %v682 = vld [vmem:[%s466 + $0x1c] sm:$0xf]
        %v683 = vld [vmem:[%s466 + $0x20] sm:$0xf]
        %v684 = vld [vmem:[%s466 + $0x24] sm:$0xf]
        %v685 = vld [vmem:[%s466 + $0x28] sm:$0xf]
        %v686 = vld [vmem:[%s466 + $0x2c] sm:$0xf]
        %v687 = vld [vmem:[%s466 + $0x30] sm:$0xf]
        %v688 = vld [vmem:[%s466 + $0x34] sm:$0xf]
        %v689 = vld [vmem:[%s466 + $0x38] sm:$0xf]
        %v690 = vld [vmem:[%s466 + $0x3c] sm:$0xf]
        %v707 = vunpack.c.l.b16 %v675
        %v708 = vunpack.c.l.b16 %v676
        %v709 = vunpack.c.l.b16 %v677
        %v710 = vunpack.c.l.b16 %v678
        %v711 = vunpack.c.l.b16 %v679
        %v712 = vunpack.c.l.b16 %v680
        %v713 = vunpack.c.l.b16 %v681
        %v714 = vunpack.c.l.b16 %v682
        %v715 = vunpack.c.l.b16 %v683
        %v716 = vunpack.c.l.b16 %v684
        %v717 = vunpack.c.l.b16 %v685
        %v718 = vunpack.c.l.b16 %v686
        %v719 = vunpack.c.l.b16 %v687
        %v720 = vunpack.c.l.b16 %v688
        %v721 = vunpack.c.l.b16 %v689
        %v722 = vunpack.c.l.b16 %v690
        %v723 = vpack.c.b16 %v708, %v707
        %v724 = vpack.c.b16 %v710, %v709
        %v725 = vpack.c.b16 %v712, %v711
        %v726 = vpack.c.b16 %v714, %v713
        %v727 = vpack.c.b16 %v716, %v715
        %v728 = vpack.c.b16 %v718, %v717
        %v729 = vpack.c.b16 %v720, %v719
        %v730 = vpack.c.b16 %v722, %v721
        %739 = vmatprep.subr.bf16.mxu0 0
        %740 = vmatpush1.bf16.msra.mxu0 %v723
        %741 = vmatprep.subr.bf16.mxu0 0
        %742 = vmatpush1.bf16.msra.mxu0 %v724
        %743 = vmatprep.subr.bf16.mxu0 0
        %744 = vmatpush1.bf16.msra.mxu0 %v725
        %745 = vmatprep.subr.bf16.mxu0 0
        %746 = vmatpush1.bf16.msra.mxu0 %v726
        %747 = vmatprep.subr.bf16.mxu0 0
        %748 = vmatpush1.bf16.msra.mxu0 %v727
        %749 = vmatprep.subr.bf16.mxu0 0
        %750 = vmatpush1.bf16.msra.mxu0 %v728
        %751 = vmatprep.subr.bf16.mxu0 0
        %752 = vmatpush1.bf16.msra.mxu0 %v729
        %753 = vmatprep.subr.bf16.mxu0 0
        %754 = vmatpush1.bf16.msra.mxu0 %v730
        %755 = vmatprep.subr.bf16.mxu0 0
        %756 = vmatpush1.bf16.msra.mxu0 0
        %757 = vmatprep.subr.bf16.mxu0 0
        %758 = vmatpush1.bf16.msra.mxu0 0
        %759 = vmatprep.subr.bf16.mxu0 0
        %760 = vmatpush1.bf16.msra.mxu0 0
        %761 = vmatprep.subr.bf16.mxu0 0
        %762 = vmatpush1.bf16.msra.mxu0 0
        %763 = vmatprep.subr.bf16.mxu0 0
        %764 = vmatpush1.bf16.msra.mxu0 0
        %765 = vmatprep.subr.bf16.mxu0 0
        %766 = vmatpush1.bf16.msra.mxu0 0
        %767 = vmatprep.subr.bf16.mxu0 0
        %768 = vmatpush1.bf16.msra.mxu0 0
        %769 = vmatprep.subr.bf16.mxu0 0
        %770 = vmatpush1.bf16.msra.mxu0 0
        %771 = vmatprep.mubr.bf16.mxu0 0
        %772 = vmatmul.mubr.bf16.gmra.mrb[0].mxu0 %v674
        %v773 = vpop.f32.mrb[0].mxu0
        %v774 = vadd.f32 0.0, %v773
        %v775 = vpop.f32.mrb[0].mxu0
        %v776 = vpop.f32.mrb[0].mxu0
        %v777 = vpop.f32.mrb[0].mxu0
        %778 = vdwg.mxu0
        %v779 = vadd.f32 %v673, %v774
        %780 = vst.msk [vmem:[#allocation4] sm:$0xff] %vm602, %v779
        // Predicated region
        $region65: #{_vit_block_impl.5} parent=59 // pred_check
          %p781 = pneg %p469
        $region66: #{_vit_block_impl.5} parent=59 // pred_check_branch
          %783 = sbr.rel (%p781) target = $region68
        $region67: #{_vit_block_impl.5} parent=59 // pred_region
          %v784 = vld [vmem:[#allocation2] sm:$0xff]
          %v785 = vld [vmem:[#allocation4] sm:$0xff]
          %v786 = vadd.f32 %v784, %v785
          %v787 = vld [vmem:[%s9] sm:$0x1]
          %v789 = vlaneseq
          %v790 = vshrl.u32 %v789, 7
          %v791 = vsub.s32 0, %v790
          %v792 = vrot.slane %v787, %v791
          %v794 = vadd.f32 %v786, %v792
          %795 = vst.msk [vmem:[%s440] sm:$0xff] %vm602, %v794
        $region68: #{_vit_block_impl.5} parent=59 // pred_fallthru
          _
        %s796 = sand.u32 %s292, 1
        %s797 = scalar_lea.sflag [#allocation6], %s796
        %s798 = sand.u32 %s292, 1
        %s799 = smul.addr %s798, 8
        %s800 = scalar_lea.vmem [#allocation5], %s799
        // Predicated region
        $region69: #{_vit_block_impl.5} parent=59 // pred_check
          %p801 = pneg %p302
        $region70: #{_vit_block_impl.5} parent=59 // pred_check_branch
          %803 = sbr.rel (%p801) target = $region72
        $region71: #{_vit_block_impl.5} parent=59 // pred_region
          %s805 = ssub.s32 128, 128
          %806 = vsyncadd %s797, %s805
          %s807 = sadd.s32 %s30, %s29
          %s808 = smul.addr %s807, 128
          %s809 = scalar_lea.hbm %s10, %s808
          %s811 = sshll.u32 %s800, 4
          %s812 = int_to_ptr.vmem [resolvable:$true] %s811
          %814 = dma.vmem_to_hbm [thread:$0]  %s812, 128, %s809, %s797
        $region72: #{_vit_block_impl.5} parent=59 // pred_fallthru
          _
      $region60: #{_vit_block_impl.5} parent=5 // pred_fallthru
        _
      %p815 = scmp.le.s32.totalorder 2, %s19
      // Predicated region
      $region73: #{_vit_block_impl.5} parent=5 // pred_check
        %p816 = pneg %p815
      $region74: #{_vit_block_impl.5} parent=5 // pred_check_branch
        %818 = sbr.rel (%p816) target = $region76
      $region75: #{_vit_block_impl.5} parent=5 // pred_region
        %s819 = ssub.s32 %s19, 2
        // Predicated region
        $region77: #{_vit_block_impl.5} parent=75 // pred_check
          %p820 = pneg %p308
        $region78: #{_vit_block_impl.5} parent=75 // pred_check_branch
          %822 = sbr.rel (%p820) target = $region80
        $region79: #{_vit_block_impl.5} parent=75 // pred_region
          %s823 = sand.u32 %s293, 1
          %s824 = scalar_lea.sflag [#allocation6], %s823
          %s825 = sand.u32 %s293, 1
          %s826 = smul.addr %s825, 8
          %s827 = scalar_lea.vmem [#allocation5], %s826
          %828 = dma.done %s824, 128
        $region80: #{_vit_block_impl.5} parent=75 // pred_fallthru
          _
      $region76: #{_vit_block_impl.5} parent=5 // pred_fallthru
        _
    $region6: #{_vit_block_impl.5} parent=1 // loop_footer
      %s23 = sadd.s32 1, %s19
    $region7: #{_vit_block_impl.5} parent=1 // loop_footer_branch
      %18 = sbr.rel target = $region3
    $region8: #{_vit_block_impl.5} parent=1 // loop_exit
      _
    %829 = vsyncpa [#allocation6], 1
    %s830 = scalar_lea.sflag [#allocation6], 1
    %831 = vsyncpa %s830, 1

</llo_original>
